<compile_context>
chip_gen: v6e
topology: v6e:2x2x1
jax: 0.10.0
libtpu: 0.0.40
codegen_flags: <defaults>
</compile_context>

<pallas_src>
import jax
import jax.numpy as jnp
from jax.experimental import pallas as pl
from jax.experimental.pallas import tpu as pltpu

NEG_SLOPE = 0.2       # torch_geometric GATConv default negative_slope
HID = 64              # GATConv hidden width
AUG = HID + 2         # hidden width augmented with [alpha_src, alpha_dst] cols


def _leaky_relu(x):
    return jnp.where(x > 0, x, NEG_SLOPE * x)


def _gat_layer(h_in, adj, w_aug, b_aug):
    """Single-head dense GATConv with attention projections folded into W.

    h_in  : (N, F_ext)   node features (may carry 2 junk alpha columns from
                         the previous layer; the matching w_aug rows are 0)
    adj   : (N, N)       adj[i, j] = 1.0 iff edge j -> i (self-loops included)
    w_aug : (F_ext, AUG) [:, :HID]=W, [:, HID]=W@a_src, [:, HID+1]=W@a_dst
    b_aug : (1, AUG)     bias in [:, :HID], zeros in the alpha columns
    """
    haug = jnp.dot(h_in, w_aug, preferred_element_type=jnp.float32)   # (N, AUG)
    a_src = haug[:, HID:HID + 1]                                      # (N, 1)
    a_dst = haug[:, HID + 1:HID + 2]                                  # (N, 1)
    # e[i, j] = leaky_relu(alpha_dst[i] + alpha_src[j]) for edge j -> i
    e = _leaky_relu(a_dst + a_src.T)                                  # (N, N)
    e = jnp.where(adj > 0, e, jnp.float32(-1e30))
    e = e - jnp.max(e, axis=-1, keepdims=True)
    p = jnp.exp(e) * adj                                              # masked, unnormalized
    # Self-loops (added upstream, GATConv add_self_loops=True) guarantee every
    # row of adj has at least one nonzero -> the denominator is never zero.
    attn = p * pl.reciprocal(jnp.sum(p, axis=-1, keepdims=True), approx=True)
    # Aggregate the full augmented features; the two junk alpha columns of the
    # result are killed by the zero rows in the next layer's / head's weights.
    return jnp.dot(attn, haug, preferred_element_type=jnp.float32) + b_aug


def pursuit_gat_kernel(x_ref, adj_ref, pool_ref,
                       w1_ref, b1_ref, w2_ref, b2_ref, w3_ref, b3_ref,
                       wh_ref, bh_ref, out_ref):
    x = x_ref[0]        # (N, F_PAD)
    adj = adj_ref[0]    # (N, N)
    pool = pool_ref[0]  # (GPB, N), rows pre-scaled by 1/count

    # 3x GATConv(+ReLU)
    h = jnp.maximum(_gat_layer(x, adj, w1_ref[...], b1_ref[...]), 0.0)
    h = jnp.maximum(_gat_layer(h, adj, w2_ref[...], b2_ref[...]), 0.0)
    h = jnp.maximum(_gat_layer(h, adj, w3_ref[...], b3_ref[...]), 0.0)

    # global_mean_pool (pool is pre-scaled) + merged policy/value head
    pooled = jnp.dot(pool, h, preferred_element_type=jnp.float32)     # (GPB, AUG)
    out_ref[0] = (jnp.dot(pooled, wh_ref[...],
                          preferred_element_type=jnp.float32) + bh_ref[...])


def pursuit_gat_forward(x_pad, adj, pool_scaled, kp, num_outputs):
    """x_pad: (E, N, F_PAD); adj: (E, N, N); pool_scaled: (E, GPB, N)."""
    E, N, F_PAD = x_pad.shape
    GPB = pool_scaled.shape[1]
    OUT_PAD = kp["wh"].shape[1]

    def env_spec(trail):
        n = len(trail)
        return pl.BlockSpec((1,) + trail, lambda e, _n=n: (e,) + (0,) * _n)

    def weight_spec(shape):
        n = len(shape)
        return pl.BlockSpec(shape, lambda e, _n=n: (0,) * _n)

    in_specs = [
        env_spec((N, F_PAD)),
        env_spec((N, N)),
        env_spec((GPB, N)),
        weight_spec(kp["w1"].shape), weight_spec(kp["b1"].shape),
        weight_spec(kp["w2"].shape), weight_spec(kp["b2"].shape),
        weight_spec(kp["w3"].shape), weight_spec(kp["b3"].shape),
        weight_spec(kp["wh"].shape), weight_spec(kp["bh"].shape),
    ]
    out_spec = pl.BlockSpec((1, GPB, OUT_PAD), lambda e: (e, 0, 0))

    out = pl.pallas_call(
        pursuit_gat_kernel,
        out_shape=jax.ShapeDtypeStruct((E, GPB, OUT_PAD), jnp.float32),
        grid=(E,),
        in_specs=in_specs,
        out_specs=out_spec,
        compiler_params=pltpu.CompilerParams(
            dimension_semantics=("parallel",)),
    )(x_pad, adj, pool_scaled,
      kp["w1"], kp["b1"], kp["w2"], kp["b2"], kp["w3"], kp["b3"],
      kp["wh"], kp["bh"])

    policy = out[:, :, :num_outputs].reshape(E * GPB, num_outputs)
    value = out[:, :, num_outputs:num_outputs + 1].reshape(E * GPB, 1)
    return policy, value


def init_params(key, f_in=3, hidden=HID, num_outputs=5):
    ks = jax.random.split(key, 16)
    s = 0.1
    p = {}
    p["w1"] = s * jax.random.normal(ks[0], (f_in, hidden), jnp.float32)
    p["as1"] = s * jax.random.normal(ks[1], (1, hidden), jnp.float32)
    p["ad1"] = s * jax.random.normal(ks[2], (1, hidden), jnp.float32)
    p["b1"] = s * jax.random.normal(ks[3], (1, hidden), jnp.float32)
    p["w2"] = s * jax.random.normal(ks[4], (hidden, hidden), jnp.float32)
    p["as2"] = s * jax.random.normal(ks[5], (1, hidden), jnp.float32)
    p["ad2"] = s * jax.random.normal(ks[6], (1, hidden), jnp.float32)
    p["b2"] = s * jax.random.normal(ks[7], (1, hidden), jnp.float32)
    p["w3"] = s * jax.random.normal(ks[8], (hidden, hidden), jnp.float32)
    p["as3"] = s * jax.random.normal(ks[9], (1, hidden), jnp.float32)
    p["ad3"] = s * jax.random.normal(ks[10], (1, hidden), jnp.float32)
    p["b3"] = s * jax.random.normal(ks[11], (1, hidden), jnp.float32)
    p["wp"] = s * jax.random.normal(ks[12], (hidden, num_outputs), jnp.float32)
    p["bp"] = s * jax.random.normal(ks[13], (1, num_outputs), jnp.float32)
    p["wv"] = s * jax.random.normal(ks[14], (hidden, 1), jnp.float32)
    p["bv"] = s * jax.random.normal(ks[15], (1, 1), jnp.float32)
    return p


def fold_params(raw, f_pad, hidden, num_outputs, out_pad):
    """Fold attention projections into W and merge the two heads."""
    def fold_layer(W, a_s, a_d, b, fin_ext):
        f_in = W.shape[0]
        wa = jnp.zeros((fin_ext, hidden + 2), jnp.float32)
        wa = wa.at[:f_in, :hidden].set(W)
        wa = wa.at[:f_in, hidden].set(W @ a_s[0])
        wa = wa.at[:f_in, hidden + 1].set(W @ a_d[0])
        ba = jnp.zeros((1, hidden + 2), jnp.float32).at[:, :hidden].set(b)
        return wa, ba

    w1, b1 = fold_layer(raw["w1"], raw["as1"], raw["ad1"], raw["b1"], f_pad)
    w2, b2 = fold_layer(raw["w2"], raw["as2"], raw["ad2"], raw["b2"], hidden + 2)
    w3, b3 = fold_layer(raw["w3"], raw["as3"], raw["ad3"], raw["b3"], hidden + 2)

    wh = jnp.zeros((hidden + 2, out_pad), jnp.float32)
    wh = wh.at[:hidden, :num_outputs].set(raw["wp"])
    wh = wh.at[:hidden, num_outputs].set(raw["wv"][:, 0])
    bh = jnp.zeros((1, out_pad), jnp.float32)
    bh = bh.at[0, :num_outputs].set(raw["bp"][0])
    bh = bh.at[0, num_outputs].set(raw["bv"][0, 0])
    return dict(w1=w1, b1=b1, w2=w2, b2=b2, w3=w3, b3=b3, wh=wh, bh=bh)


def reference_forward(x, adj, pool_onehot, raw):
    """Pure-JAX reference of GATConv x3 -> ReLU -> mean_pool -> heads."""
    def lrelu(v):
        return jnp.where(v > 0, v, NEG_SLOPE * v)

    def gat(h, W, a_s, a_d, b):
        hW = h @ W
        s = jnp.sum(hW * a_s, axis=-1, keepdims=True)
        d = jnp.sum(hW * a_d, axis=-1, keepdims=True)
        e = jnp.where(adj > 0, lrelu(d + s.T), -1e30)
        e = e - jnp.max(e, axis=-1, keepdims=True)
        p = jnp.where(adj > 0, jnp.exp(e), 0.0)
        attn = p / jnp.sum(p, axis=-1, keepdims=True)
        return attn @ hW + b

    h = jax.nn.relu(gat(x, raw["w1"], raw["as1"], raw["ad1"], raw["b1"]))
    h = jax.nn.relu(gat(h, raw["w2"], raw["as2"], raw["ad2"], raw["b2"]))
    h = jax.nn.relu(gat(h, raw["w3"], raw["as3"], raw["ad3"], raw["b3"]))
    pooled = (pool_onehot @ h) / jnp.sum(pool_onehot, axis=-1, keepdims=True)
    return pooled @ raw["wp"] + raw["bp"], pooled @ raw["wv"] + raw["bv"]


if __name__ == "__main__":
    key = jax.random.PRNGKey(0)
    k_x, k_adj, k_p = jax.random.split(key, 3)

    E = 8                   # environments batched per pallas_call (grid axis)
    GPB = 2                 # graphs per environment
    NODES_PER_GRAPH = 8
    N = GPB * NODES_PER_GRAPH
    F_IN = 3                # GATConv(3, 64)
    F_PAD = 8               # pad input features to a sublane multiple
    NUM_OUTPUTS = 5         # pursuit action space size
    OUT_PAD = 128           # lane-dense merged policy+value output slab

    # node features (stand-in for GraphTransformer.transform on masked obs)
    x = jax.random.normal(k_x, (E, N, F_IN), jnp.float32)
    x_pad = jnp.zeros((E, N, F_PAD), jnp.float32).at[:, :, :F_IN].set(x)

    # random per-env adjacency, restricted to within each graph, + self-loops
    batch_ids = jnp.repeat(jnp.arange(GPB), NODES_PER_GRAPH)          # (N,)
    block_mask = (batch_ids[:, None] == batch_ids[None, :]).astype(jnp.float32)
    rand_edges = (jax.random.uniform(k_adj, (E, N, N)) < 0.35).astype(jnp.float32)
    adj = jnp.maximum(rand_edges, jnp.eye(N, dtype=jnp.float32)) * block_mask[None]

    # batch one-hot pooling matrix; pre-scale rows by 1/count (mean pool)
    pool_onehot = (batch_ids[None, :] == jnp.arange(GPB)[:, None]).astype(jnp.float32)
    pool_scaled = pool_onehot / jnp.sum(pool_onehot, axis=-1, keepdims=True)
    pool_scaled = jnp.broadcast_to(pool_scaled[None], (E, GPB, N))

    raw_params = init_params(k_p, F_IN, HID, NUM_OUTPUTS)
    kernel_params = fold_params(raw_params, F_PAD, HID, NUM_OUTPUTS, OUT_PAD)

    policy_out, value_out = pursuit_gat_forward(
        x_pad, adj, pool_scaled, kernel_params, NUM_OUTPUTS)
    jax.block_until_ready((policy_out, value_out))

    # pure-JAX reference check
    pol_ref, val_ref = [], []
    for e in range(E):
        p_e, v_e = reference_forward(x[e], adj[e], pool_onehot, raw_params)
        pol_ref.append(p_e)
        val_ref.append(v_e)
    pol_ref = jnp.concatenate(pol_ref, axis=0)
    val_ref = jnp.concatenate(val_ref, axis=0)

    assert policy_out.shape == (E * GPB, NUM_OUTPUTS)
    assert value_out.shape == (E * GPB, 1)
    assert bool(jnp.all(jnp.isfinite(policy_out))) and bool(jnp.all(jnp.isfinite(value_out)))
    max_err = max(float(jnp.max(jnp.abs(policy_out - pol_ref))),
                  float(jnp.max(jnp.abs(value_out - val_ref))))
    assert max_err < 5e-2, f"max abs error vs reference: {max_err}"
    print("KERNEL_OK")
</pallas_src>

<mosaic_0001>
module attributes {stable_mosaic.version = 11 : i64} {
  func.func @pursuit_gat_kernel(%arg0: i32, %arg1: memref<1x16x8xf32, #tpu.memory_space<vmem>>, %arg2: memref<1x16x16xf32, #tpu.memory_space<vmem>>, %arg3: memref<1x2x16xf32, #tpu.memory_space<vmem>>, %arg4: memref<8x66xf32, #tpu.memory_space<vmem>>, %arg5: memref<1x66xf32, #tpu.memory_space<vmem>>, %arg6: memref<66x66xf32, #tpu.memory_space<vmem>>, %arg7: memref<1x66xf32, #tpu.memory_space<vmem>>, %arg8: memref<66x66xf32, #tpu.memory_space<vmem>>, %arg9: memref<1x66xf32, #tpu.memory_space<vmem>>, %arg10: memref<66x128xf32, #tpu.memory_space<vmem>>, %arg11: memref<1x128xf32, #tpu.memory_space<vmem>>, %arg12: memref<1x2x128xf32, #tpu.memory_space<vmem>>) attributes {dimension_semantics = [#tpu.dimension_semantics<parallel>], iteration_bounds = array<i64: 8>, scalar_prefetch = 0 : i64, scratch_operands = 0 : i64, tpu.core_type = #tpu.core_type<tc>, window_params = [{transform_indices = @transform_0, window_bounds = array<i64: 1, 16, 8>}, {transform_indices = @transform_1, window_bounds = array<i64: 1, 16, 16>}, {transform_indices = @transform_2, window_bounds = array<i64: 1, 2, 16>}, {pipeline_mode = #tpu.pipeline_mode<synchronous>, transform_indices = @transform_3, window_bounds = array<i64: 8, 66>}, {pipeline_mode = #tpu.pipeline_mode<synchronous>, transform_indices = @transform_4, window_bounds = array<i64: 1, 66>}, {pipeline_mode = #tpu.pipeline_mode<synchronous>, transform_indices = @transform_5, window_bounds = array<i64: 66, 66>}, {pipeline_mode = #tpu.pipeline_mode<synchronous>, transform_indices = @transform_6, window_bounds = array<i64: 1, 66>}, {pipeline_mode = #tpu.pipeline_mode<synchronous>, transform_indices = @transform_7, window_bounds = array<i64: 66, 66>}, {pipeline_mode = #tpu.pipeline_mode<synchronous>, transform_indices = @transform_8, window_bounds = array<i64: 1, 66>}, {pipeline_mode = #tpu.pipeline_mode<synchronous>, transform_indices = @transform_9, window_bounds = array<i64: 66, 128>}, {pipeline_mode = #tpu.pipeline_mode<synchronous>, transform_indices = @transform_10, window_bounds = array<i64: 1, 128>}, {transform_indices = @transform_11, window_bounds = array<i64: 1, 2, 128>}]} {
    %c0 = arith.constant 0 : index
    %c0_0 = arith.constant 0 : index
    %c0_1 = arith.constant 0 : index
    %0 = vector.load %arg1[%c0, %c0_0, %c0_1] : memref<1x16x8xf32, #tpu.memory_space<vmem>>, vector<1x16x8xf32>
    %1 = vector.shape_cast %0 : vector<1x16x8xf32> to vector<16x8xf32>
    %c0_2 = arith.constant 0 : index
    %c0_3 = arith.constant 0 : index
    %c0_4 = arith.constant 0 : index
    %2 = vector.load %arg2[%c0_2, %c0_3, %c0_4] : memref<1x16x16xf32, #tpu.memory_space<vmem>>, vector<1x16x16xf32>
    %3 = vector.shape_cast %2 : vector<1x16x16xf32> to vector<16x16xf32>
    %c0_5 = arith.constant 0 : index
    %c0_6 = arith.constant 0 : index
    %c0_7 = arith.constant 0 : index
    %4 = vector.load %arg3[%c0_5, %c0_6, %c0_7] : memref<1x2x16xf32, #tpu.memory_space<vmem>>, vector<1x2x16xf32>
    %5 = vector.shape_cast %4 : vector<1x2x16xf32> to vector<2x16xf32>
    %c0_8 = arith.constant 0 : index
    %c0_9 = arith.constant 0 : index
    %6 = vector.load %arg4[%c0_8, %c0_9] : memref<8x66xf32, #tpu.memory_space<vmem>>, vector<8x66xf32>
    %c0_10 = arith.constant 0 : index
    %c0_11 = arith.constant 0 : index
    %7 = vector.load %arg5[%c0_10, %c0_11] : memref<1x66xf32, #tpu.memory_space<vmem>>, vector<1x66xf32>
    %cst = arith.constant dense<0.000000e+00> : vector<16x66xf32>
    %8 = tpu.matmul %1, %6, %cst {dimension_numbers = #tpu.dot_dimension_numbers<[1], [0], [0], [1], [0, 0, 1, 1], [], []>} : vector<16x8xf32>, vector<8x66xf32>, vector<16x66xf32> -> vector<16x66xf32>
    %9 = vector.extract_strided_slice %8 {offsets = [0, 64], sizes = [16, 1], strides = [1, 1]} : vector<16x66xf32> to vector<16x1xf32>
    %10 = vector.extract_strided_slice %8 {offsets = [0, 65], sizes = [16, 1], strides = [1, 1]} : vector<16x66xf32> to vector<16x1xf32>
    %11 = tpu.transpose %9, [1, 0] : vector<16x1xf32> -> vector<1x16xf32>
    %12 = vector.broadcast %10 : vector<16x1xf32> to vector<16x16xf32>
    %13 = vector.broadcast %11 : vector<1x16xf32> to vector<16x16xf32>
    %14 = arith.addf %12, %13 : vector<16x16xf32>
    %cst_12 = arith.constant 0.000000e+00 : f32
    %15 = vector.broadcast %cst_12 : f32 to vector<16x16xf32>
    %16 = arith.cmpf ogt, %14, %15 : vector<16x16xf32>
    %cst_13 = arith.constant 2.000000e-01 : f32
    %17 = vector.broadcast %cst_13 : f32 to vector<16x16xf32>
    %18 = arith.mulf %17, %14 : vector<16x16xf32>
    %19 = arith.select %16, %14, %18 : vector<16x16xi1>, vector<16x16xf32>
    %cst_14 = arith.constant 0.000000e+00 : f32
    %20 = vector.broadcast %cst_14 : f32 to vector<16x16xf32>
    %21 = arith.cmpf ogt, %3, %20 : vector<16x16xf32>
    %cst_15 = arith.constant -1.000000e+30 : f32
    %22 = vector.broadcast %cst_15 : f32 to vector<16x16xf32>
    %23 = arith.select %21, %19, %22 : vector<16x16xi1>, vector<16x16xf32>
    %cst_16 = arith.constant dense<0xFF800000> : vector<16xf32>
    %24 = vector.multi_reduction <maximumf>, %23, %cst_16 [1] : vector<16x16xf32> to vector<16xf32>
    %25 = vector.shape_cast %24 : vector<16xf32> to vector<16x1xf32>
    %26 = vector.broadcast %25 : vector<16x1xf32> to vector<16x16xf32>
    %27 = arith.subf %23, %26 : vector<16x16xf32>
    %28 = math.exp %27 : vector<16x16xf32>
    %29 = arith.mulf %28, %3 : vector<16x16xf32>
    %cst_17 = arith.constant dense<0.000000e+00> : vector<16xf32>
    %30 = vector.multi_reduction <add>, %29, %cst_17 [1] : vector<16x16xf32> to vector<16xf32>
    %31 = vector.shape_cast %30 : vector<16xf32> to vector<16x1xf32>
    %32 = tpu.reciprocal %31 {approx = true} : vector<16x1xf32> -> vector<16x1xf32>
    %33 = vector.broadcast %32 : vector<16x1xf32> to vector<16x16xf32>
    %34 = arith.mulf %29, %33 : vector<16x16xf32>
    %cst_18 = arith.constant dense<0.000000e+00> : vector<16x66xf32>
    %35 = tpu.matmul %34, %8, %cst_18 {dimension_numbers = #tpu.dot_dimension_numbers<[1], [0], [0], [1], [0, 0, 1, 1], [], []>} : vector<16x16xf32>, vector<16x66xf32>, vector<16x66xf32> -> vector<16x66xf32>
    %36 = vector.broadcast %7 : vector<1x66xf32> to vector<16x66xf32>
    %37 = arith.addf %35, %36 : vector<16x66xf32>
    %cst_19 = arith.constant 0.000000e+00 : f32
    %38 = vector.broadcast %cst_19 : f32 to vector<16x66xf32>
    %39 = arith.maximumf %37, %38 : vector<16x66xf32>
    %c0_20 = arith.constant 0 : index
    %c0_21 = arith.constant 0 : index
    %40 = vector.load %arg6[%c0_20, %c0_21] : memref<66x66xf32, #tpu.memory_space<vmem>>, vector<66x66xf32>
    %c0_22 = arith.constant 0 : index
    %c0_23 = arith.constant 0 : index
    %41 = vector.load %arg7[%c0_22, %c0_23] : memref<1x66xf32, #tpu.memory_space<vmem>>, vector<1x66xf32>
    %cst_24 = arith.constant dense<0.000000e+00> : vector<16x66xf32>
    %42 = tpu.matmul %39, %40, %cst_24 {dimension_numbers = #tpu.dot_dimension_numbers<[1], [0], [0], [1], [0, 0, 1, 1], [], []>} : vector<16x66xf32>, vector<66x66xf32>, vector<16x66xf32> -> vector<16x66xf32>
    %43 = vector.extract_strided_slice %42 {offsets = [0, 64], sizes = [16, 1], strides = [1, 1]} : vector<16x66xf32> to vector<16x1xf32>
    %44 = vector.extract_strided_slice %42 {offsets = [0, 65], sizes = [16, 1], strides = [1, 1]} : vector<16x66xf32> to vector<16x1xf32>
    %45 = tpu.transpose %43, [1, 0] : vector<16x1xf32> -> vector<1x16xf32>
    %46 = vector.broadcast %44 : vector<16x1xf32> to vector<16x16xf32>
    %47 = vector.broadcast %45 : vector<1x16xf32> to vector<16x16xf32>
    %48 = arith.addf %46, %47 : vector<16x16xf32>
    %cst_25 = arith.constant 0.000000e+00 : f32
    %49 = vector.broadcast %cst_25 : f32 to vector<16x16xf32>
    %50 = arith.cmpf ogt, %48, %49 : vector<16x16xf32>
    %cst_26 = arith.constant 2.000000e-01 : f32
    %51 = vector.broadcast %cst_26 : f32 to vector<16x16xf32>
    %52 = arith.mulf %51, %48 : vector<16x16xf32>
    %53 = arith.select %50, %48, %52 : vector<16x16xi1>, vector<16x16xf32>
    %cst_27 = arith.constant 0.000000e+00 : f32
    %54 = vector.broadcast %cst_27 : f32 to vector<16x16xf32>
    %55 = arith.cmpf ogt, %3, %54 : vector<16x16xf32>
    %cst_28 = arith.constant -1.000000e+30 : f32
    %56 = vector.broadcast %cst_28 : f32 to vector<16x16xf32>
    %57 = arith.select %55, %53, %56 : vector<16x16xi1>, vector<16x16xf32>
    %cst_29 = arith.constant dense<0xFF800000> : vector<16xf32>
    %58 = vector.multi_reduction <maximumf>, %57, %cst_29 [1] : vector<16x16xf32> to vector<16xf32>
    %59 = vector.shape_cast %58 : vector<16xf32> to vector<16x1xf32>
    %60 = vector.broadcast %59 : vector<16x1xf32> to vector<16x16xf32>
    %61 = arith.subf %57, %60 : vector<16x16xf32>
    %62 = math.exp %61 : vector<16x16xf32>
    %63 = arith.mulf %62, %3 : vector<16x16xf32>
    %cst_30 = arith.constant dense<0.000000e+00> : vector<16xf32>
    %64 = vector.multi_reduction <add>, %63, %cst_30 [1] : vector<16x16xf32> to vector<16xf32>
    %65 = vector.shape_cast %64 : vector<16xf32> to vector<16x1xf32>
    %66 = tpu.reciprocal %65 {approx = true} : vector<16x1xf32> -> vector<16x1xf32>
    %67 = vector.broadcast %66 : vector<16x1xf32> to vector<16x16xf32>
    %68 = arith.mulf %63, %67 : vector<16x16xf32>
    %cst_31 = arith.constant dense<0.000000e+00> : vector<16x66xf32>
    %69 = tpu.matmul %68, %42, %cst_31 {dimension_numbers = #tpu.dot_dimension_numbers<[1], [0], [0], [1], [0, 0, 1, 1], [], []>} : vector<16x16xf32>, vector<16x66xf32>, vector<16x66xf32> -> vector<16x66xf32>
    %70 = vector.broadcast %41 : vector<1x66xf32> to vector<16x66xf32>
    %71 = arith.addf %69, %70 : vector<16x66xf32>
    %cst_32 = arith.constant 0.000000e+00 : f32
    %72 = vector.broadcast %cst_32 : f32 to vector<16x66xf32>
    %73 = arith.maximumf %71, %72 : vector<16x66xf32>
    %c0_33 = arith.constant 0 : index
    %c0_34 = arith.constant 0 : index
    %74 = vector.load %arg8[%c0_33, %c0_34] : memref<66x66xf32, #tpu.memory_space<vmem>>, vector<66x66xf32>
    %c0_35 = arith.constant 0 : index
    %c0_36 = arith.constant 0 : index
    %75 = vector.load %arg9[%c0_35, %c0_36] : memref<1x66xf32, #tpu.memory_space<vmem>>, vector<1x66xf32>
    %cst_37 = arith.constant dense<0.000000e+00> : vector<16x66xf32>
    %76 = tpu.matmul %73, %74, %cst_37 {dimension_numbers = #tpu.dot_dimension_numbers<[1], [0], [0], [1], [0, 0, 1, 1], [], []>} : vector<16x66xf32>, vector<66x66xf32>, vector<16x66xf32> -> vector<16x66xf32>
    %77 = vector.extract_strided_slice %76 {offsets = [0, 64], sizes = [16, 1], strides = [1, 1]} : vector<16x66xf32> to vector<16x1xf32>
    %78 = vector.extract_strided_slice %76 {offsets = [0, 65], sizes = [16, 1], strides = [1, 1]} : vector<16x66xf32> to vector<16x1xf32>
    %79 = tpu.transpose %77, [1, 0] : vector<16x1xf32> -> vector<1x16xf32>
    %80 = vector.broadcast %78 : vector<16x1xf32> to vector<16x16xf32>
    %81 = vector.broadcast %79 : vector<1x16xf32> to vector<16x16xf32>
    %82 = arith.addf %80, %81 : vector<16x16xf32>
    %cst_38 = arith.constant 0.000000e+00 : f32
    %83 = vector.broadcast %cst_38 : f32 to vector<16x16xf32>
    %84 = arith.cmpf ogt, %82, %83 : vector<16x16xf32>
    %cst_39 = arith.constant 2.000000e-01 : f32
    %85 = vector.broadcast %cst_39 : f32 to vector<16x16xf32>
    %86 = arith.mulf %85, %82 : vector<16x16xf32>
    %87 = arith.select %84, %82, %86 : vector<16x16xi1>, vector<16x16xf32>
    %cst_40 = arith.constant 0.000000e+00 : f32
    %88 = vector.broadcast %cst_40 : f32 to vector<16x16xf32>
    %89 = arith.cmpf ogt, %3, %88 : vector<16x16xf32>
    %cst_41 = arith.constant -1.000000e+30 : f32
    %90 = vector.broadcast %cst_41 : f32 to vector<16x16xf32>
    %91 = arith.select %89, %87, %90 : vector<16x16xi1>, vector<16x16xf32>
    %cst_42 = arith.constant dense<0xFF800000> : vector<16xf32>
    %92 = vector.multi_reduction <maximumf>, %91, %cst_42 [1] : vector<16x16xf32> to vector<16xf32>
    %93 = vector.shape_cast %92 : vector<16xf32> to vector<16x1xf32>
    %94 = vector.broadcast %93 : vector<16x1xf32> to vector<16x16xf32>
    %95 = arith.subf %91, %94 : vector<16x16xf32>
    %96 = math.exp %95 : vector<16x16xf32>
    %97 = arith.mulf %96, %3 : vector<16x16xf32>
    %cst_43 = arith.constant dense<0.000000e+00> : vector<16xf32>
    %98 = vector.multi_reduction <add>, %97, %cst_43 [1] : vector<16x16xf32> to vector<16xf32>
    %99 = vector.shape_cast %98 : vector<16xf32> to vector<16x1xf32>
    %100 = tpu.reciprocal %99 {approx = true} : vector<16x1xf32> -> vector<16x1xf32>
    %101 = vector.broadcast %100 : vector<16x1xf32> to vector<16x16xf32>
    %102 = arith.mulf %97, %101 : vector<16x16xf32>
    %cst_44 = arith.constant dense<0.000000e+00> : vector<16x66xf32>
    %103 = tpu.matmul %102, %76, %cst_44 {dimension_numbers = #tpu.dot_dimension_numbers<[1], [0], [0], [1], [0, 0, 1, 1], [], []>} : vector<16x16xf32>, vector<16x66xf32>, vector<16x66xf32> -> vector<16x66xf32>
    %104 = vector.broadcast %75 : vector<1x66xf32> to vector<16x66xf32>
    %105 = arith.addf %103, %104 : vector<16x66xf32>
    %cst_45 = arith.constant 0.000000e+00 : f32
    %106 = vector.broadcast %cst_45 : f32 to vector<16x66xf32>
    %107 = arith.maximumf %105, %106 : vector<16x66xf32>
    %cst_46 = arith.constant dense<0.000000e+00> : vector<2x66xf32>
    %108 = tpu.matmul %5, %107, %cst_46 {dimension_numbers = #tpu.dot_dimension_numbers<[1], [0], [0], [1], [0, 0, 1, 1], [], []>} : vector<2x16xf32>, vector<16x66xf32>, vector<2x66xf32> -> vector<2x66xf32>
    %c0_47 = arith.constant 0 : index
    %c0_48 = arith.constant 0 : index
    %109 = vector.load %arg10[%c0_47, %c0_48] : memref<66x128xf32, #tpu.memory_space<vmem>>, vector<66x128xf32>
    %cst_49 = arith.constant dense<0.000000e+00> : vector<2x128xf32>
    %110 = tpu.matmul %108, %109, %cst_49 {dimension_numbers = #tpu.dot_dimension_numbers<[1], [0], [0], [1], [0, 0, 1, 1], [], []>} : vector<2x66xf32>, vector<66x128xf32>, vector<2x128xf32> -> vector<2x128xf32>
    %c0_50 = arith.constant 0 : index
    %c0_51 = arith.constant 0 : index
    %111 = vector.load %arg11[%c0_50, %c0_51] : memref<1x128xf32, #tpu.memory_space<vmem>>, vector<1x128xf32>
    %112 = vector.broadcast %111 : vector<1x128xf32> to vector<2x128xf32>
    %113 = arith.addf %110, %112 : vector<2x128xf32>
    %c0_52 = arith.constant 0 : index
    %c0_53 = arith.constant 0 : index
    %c0_54 = arith.constant 0 : index
    %114 = vector.load %arg12[%c0_52, %c0_53, %c0_54] : memref<1x2x128xf32, #tpu.memory_space<vmem>>, vector<1x2x128xf32>
    %115 = vector.shape_cast %114 : vector<1x2x128xf32> to vector<2x128xf32>
    %116 = vector.shape_cast %113 : vector<2x128xf32> to vector<1x2x128xf32>
    tpu.vector_store %arg12[%c0_52, %c0_53, %c0_54], %116 {strides = array<i32>} : memref<1x2x128xf32, #tpu.memory_space<vmem>>, vector<1x2x128xf32>,
    return
  }
  func.func @transform_0(%arg0: i32) -> (i32, i32, i32) {
    %c0_i32 = arith.constant 0 : i32
    %c0_i32_0 = arith.constant 0 : i32
    %c0_i32_1 = arith.constant 0 : i32
    return %arg0, %c0_i32, %c0_i32_0 : i32, i32, i32
  }
  func.func @transform_1(%arg0: i32) -> (i32, i32, i32) {
    %c0_i32 = arith.constant 0 : i32
    %c0_i32_0 = arith.constant 0 : i32
    %c0_i32_1 = arith.constant 0 : i32
    return %arg0, %c0_i32, %c0_i32_0 : i32, i32, i32
  }
  func.func @transform_2(%arg0: i32) -> (i32, i32, i32) {
    %c0_i32 = arith.constant 0 : i32
    %c0_i32_0 = arith.constant 0 : i32
    %c0_i32_1 = arith.constant 0 : i32
    return %arg0, %c0_i32, %c0_i32_0 : i32, i32, i32
  }
  func.func @transform_3(%arg0: i32) -> (i32, i32) {
    %c0_i32 = arith.constant 0 : i32
    %c0_i32_0 = arith.constant 0 : i32
    %c0_i32_1 = arith.constant 0 : i32
    return %c0_i32, %c0_i32_0 : i32, i32
  }
  func.func @transform_4(%arg0: i32) -> (i32, i32) {
    %c0_i32 = arith.constant 0 : i32
    %c0_i32_0 = arith.constant 0 : i32
    %c0_i32_1 = arith.constant 0 : i32
    return %c0_i32, %c0_i32_0 : i32, i32
  }
  func.func @transform_5(%arg0: i32) -> (i32, i32) {
    %c0_i32 = arith.constant 0 : i32
    %c0_i32_0 = arith.constant 0 : i32
    %c0_i32_1 = arith.constant 0 : i32
    return %c0_i32, %c0_i32_0 : i32, i32
  }
  func.func @transform_6(%arg0: i32) -> (i32, i32) {
    %c0_i32 = arith.constant 0 : i32
    %c0_i32_0 = arith.constant 0 : i32
    %c0_i32_1 = arith.constant 0 : i32
    return %c0_i32, %c0_i32_0 : i32, i32
  }
  func.func @transform_7(%arg0: i32) -> (i32, i32) {
    %c0_i32 = arith.constant 0 : i32
    %c0_i32_0 = arith.constant 0 : i32
    %c0_i32_1 = arith.constant 0 : i32
    return %c0_i32, %c0_i32_0 : i32, i32
  }
  func.func @transform_8(%arg0: i32) -> (i32, i32) {
    %c0_i32 = arith.constant 0 : i32
    %c0_i32_0 = arith.constant 0 : i32
    %c0_i32_1 = arith.constant 0 : i32
    return %c0_i32, %c0_i32_0 : i32, i32
  }
  func.func @transform_9(%arg0: i32) -> (i32, i32) {
    %c0_i32 = arith.constant 0 : i32
    %c0_i32_0 = arith.constant 0 : i32
    %c0_i32_1 = arith.constant 0 : i32
    return %c0_i32, %c0_i32_0 : i32, i32
  }
  func.func @transform_10(%arg0: i32) -> (i32, i32) {
    %c0_i32 = arith.constant 0 : i32
    %c0_i32_0 = arith.constant 0 : i32
    %c0_i32_1 = arith.constant 0 : i32
    return %c0_i32, %c0_i32_0 : i32, i32
  }
  func.func @transform_11(%arg0: i32) -> (i32, i32, i32) {
    %c0_i32 = arith.constant 0 : i32
    %c0_i32_0 = arith.constant 0 : i32
    %c0_i32_1 = arith.constant 0 : i32
    return %arg0, %c0_i32, %c0_i32_0 : i32, i32, i32
  }
}

</mosaic_0001>

<llo_original>
// kernel: tpu_custom_call.1
$region0: #{tpu_custom_call.1}
  #allocation0 [shape = 'u32[]', space=smem, size = 0x4, offset = 0x4, fixed_abs, tag = 'smem constant byte address 0x4 - core index']
  #allocation1 [shape = 'u32[144,128]{1,0:T(1,128)}', space=vmem, size = 0x12000, scoped, tag = 'internal scratch']
  %s0 = inlined_call_operand.vmem [shape: f32[8,16,8], index: 0, kind: input, shape index: {}]
  %s1 = inlined_call_operand.vmem [shape: f32[8,16,16], index: 1, kind: input, shape index: {}]
  %s2 = inlined_call_operand.hbm [shape: f32[8,2,16], index: 2, kind: input, shape index: {}]
  %s3 = inlined_call_operand.hbm [shape: f32[8,66], index: 3, kind: input, shape index: {}]
  %s4 = inlined_call_operand.vmem [shape: f32[1,66], index: 4, kind: input, shape index: {}]
  %s5 = inlined_call_operand.hbm [shape: f32[66,66], index: 5, kind: input, shape index: {}]
  %s6 = inlined_call_operand.vmem [shape: f32[1,66], index: 6, kind: input, shape index: {}]
  %s7 = inlined_call_operand.vmem [shape: f32[66,66], index: 7, kind: input, shape index: {}]
  %s8 = inlined_call_operand.vmem [shape: f32[1,66], index: 8, kind: input, shape index: {}]
  %s9 = inlined_call_operand.hbm [shape: f32[66,128], index: 9, kind: input, shape index: {}]
  %s10 = inlined_call_operand.vmem [shape: f32[1,128], index: 10, kind: input, shape index: {}]
  %s11 = inlined_call_operand.hbm [shape: f32[8,2,128], index: 11, kind: output, shape index: {}]
  %s12 = sld [smem:[#allocation0]]
  $region93: #{tpu_custom_call.1} parent=0
    _
  %s14 = ssub.s32 1, %s12
  %s15 = scalar_select 0, %s14, %s12
  $region1: #{tpu_custom_call.1} parent=0
    #allocation2 [shape = 'u8[2048]{0}', space=vmem, size = 0x800, scoped, tag = 'input window, operand 2']
    #allocation3 [shape = 's32[2]{0}', space=sflag, size = 0x8, scoped, tag = 'scoped memory for tpu_custom_call.1']
    #allocation4 [shape = 's32[2]{0}', space=sflag, size = 0x8, scoped, tag = 'scoped memory for tpu_custom_call.1']
    #allocation5 [shape = 'u8[4096]{0}', space=vmem, size = 0x1000, scoped, tag = 'input window, operand 3, single buffered']
    #allocation6 [shape = 's32[1]{0}', space=sflag, size = 0x4, scoped, tag = 'scoped memory for tpu_custom_call.1']
    #allocation7 [shape = 'u8[36864]{0}', space=vmem, size = 0x9000, scoped, tag = 'input window, operand 5, single buffered']
    #allocation8 [shape = 'u8[36864]{0}', space=vmem, size = 0x9000, scoped, tag = 'input window, operand 9, single buffered']
    #allocation9 [shape = 's32[1]{0}', space=sflag, size = 0x4, scoped, tag = 'scoped memory for tpu_custom_call.1']
    #allocation10 [shape = 'u8[2048]{0}', space=vmem, size = 0x800, scoped, tag = 'output window, operand 0']
    %16 = vsyncpa [#allocation3], 0
    %s17 = scalar_lea.sflag [#allocation3], 1
    %18 = vsyncpa %s17, 0
    %19 = vsyncpa [#allocation6], 0
    %20 = vsyncpa [#allocation9], 0
    %21 = vsyncpa [#allocation4], 0
    %s22 = scalar_lea.sflag [#allocation4], 1
    %23 = vsyncpa %s22, 0
    loop: start=0, step=1, limit=10
    $region2: #{tpu_custom_call.1} parent=1 // loop_pre_header
      _
    $region3: #{tpu_custom_call.1} parent=1 // loop_header
      %s25 = sphi 0, %s29
      %p26 = scmp.ge.s32.totalorder %s25, 10
      %s35 = sphi 0, %s37
      %s38 = sphi 0, %s35
      %s39 = sphi 0, %s38
      %s55 = sphi 0, %s39
      %s61 = sphi 0, %s63
      %s64 = sphi 0, %s61
      %s65 = sphi 0, %s64
      %s81 = sphi 0, %s65
      %s87 = sphi 0, %s89
      %s90 = sphi 0, %s87
      %s91 = sphi 0, %s90
      %s107 = sphi 0, %s91
      %s111 = sphi 0, %s111
      %s113 = sphi 0, %s111
      %s114 = sphi 0, %s113
      %s128 = sphi 0, %s114
      %s132 = sphi 0, %s132
      %s134 = sphi 0, %s132
      %s135 = sphi 0, %s134
      %s149 = sphi 0, %s135
      %s153 = sphi 0, %s153
      %s155 = sphi 0, %s153
      %s156 = sphi 0, %s155
      %s170 = sphi 0, %s156
      %s174 = sphi 0, %s174
      %s176 = sphi 0, %s174
      %s177 = sphi 0, %s176
      %s191 = sphi 0, %s177
      %s195 = sphi 0, %s195
      %s197 = sphi 0, %s195
      %s198 = sphi 0, %s197
      %s212 = sphi 0, %s198
      %s216 = sphi 0, %s216
      %s218 = sphi 0, %s216
      %s219 = sphi 0, %s218
      %s233 = sphi 0, %s219
      %s237 = sphi 0, %s237
      %s239 = sphi 0, %s237
      %s240 = sphi 0, %s239
      %s254 = sphi 0, %s240
      %s258 = sphi 0, %s258
      %s260 = sphi 0, %s258
      %s261 = sphi 0, %s260
      %s275 = sphi 0, %s261
      %s281 = sphi 0, %s283
      %s284 = sphi 0, %s281
      %s285 = sphi 0, %s284
      %s301 = sphi 0, %s285
    $region4: #{tpu_custom_call.1} parent=1 // loop_header_branch
      %28 = sbr.rel (%p26) target = $region8
    $region5: #{tpu_custom_call.1} parent=1 // loop_body
      %s30 = ssub.s32 %s25, 1
      %s31 = ssub.s32 %s25, 2
      %s32 = sadd.s32 %s25, 1
      %s33 = ssub.s32 %s25, %s32
      %p34 = scmp.eq.s32.totalorder %s33, 0
      %s36 = sadd.s32 %s35, 1
      %s37 = scalar_select %p34, %s35, %s36
      %p40 = pneg %p34
      %p41 = scmp.eq.s32.totalorder %s25, 7
      %p42 = por %p40, %p41
      %p43 = scmp.ne.s32.totalorder %s35, %s38
      %p44 = scmp.eq.s32.totalorder %s25, 0
      %p45 = por %p43, %p44
      %p46 = scmp.ne.s32.totalorder %s35, %s38
      %p47 = scmp.eq.s32.totalorder %s30, 7
      %p48 = por %p46, %p47
      %p49 = scmp.ne.s32.totalorder %s38, %s39
      %p50 = scmp.eq.s32.totalorder %s30, 0
      %p51 = por %p49, %p50
      %p52 = scmp.ne.s32.totalorder %s38, %s39
      %p53 = scmp.eq.s32.totalorder %s31, 7
      %p54 = por %p52, %p53
      %p56 = scmp.ne.s32.totalorder %s39, %s55
      %p57 = scmp.eq.s32.totalorder %s31, 0
      %p58 = por %p56, %p57
      %s59 = ssub.s32 %s25, %s32
      %p60 = scmp.eq.s32.totalorder %s59, 0
      %s62 = sadd.s32 %s61, 1
      %s63 = scalar_select %p60, %s61, %s62
      %p66 = pneg %p60
      %p67 = scmp.eq.s32.totalorder %s25, 7
      %p68 = por %p66, %p67
      %p69 = scmp.ne.s32.totalorder %s61, %s64
      %p70 = scmp.eq.s32.totalorder %s25, 0
      %p71 = por %p69, %p70
      %p72 = scmp.ne.s32.totalorder %s61, %s64
      %p73 = scmp.eq.s32.totalorder %s30, 7
      %p74 = por %p72, %p73
      %p75 = scmp.ne.s32.totalorder %s64, %s65
      %p76 = scmp.eq.s32.totalorder %s30, 0
      %p77 = por %p75, %p76
      %p78 = scmp.ne.s32.totalorder %s64, %s65
      %p79 = scmp.eq.s32.totalorder %s31, 7
      %p80 = por %p78, %p79
      %p82 = scmp.ne.s32.totalorder %s65, %s81
      %p83 = scmp.eq.s32.totalorder %s31, 0
      %p84 = por %p82, %p83
      %s85 = ssub.s32 %s25, %s32
      %p86 = scmp.eq.s32.totalorder %s85, 0
      %s88 = sadd.s32 %s87, 1
      %s89 = scalar_select %p86, %s87, %s88
      %p92 = pneg %p86
      %p93 = scmp.eq.s32.totalorder %s25, 7
      %p94 = por %p92, %p93
      %p95 = scmp.ne.s32.totalorder %s87, %s90
      %p96 = scmp.eq.s32.totalorder %s25, 0
      %p97 = por %p95, %p96
      %p98 = scmp.ne.s32.totalorder %s87, %s90
      %p99 = scmp.eq.s32.totalorder %s30, 7
      %p100 = por %p98, %p99
      %p101 = scmp.ne.s32.totalorder %s90, %s91
      %p102 = scmp.eq.s32.totalorder %s30, 0
      %p103 = por %p101, %p102
      %p104 = scmp.ne.s32.totalorder %s90, %s91
      %p105 = scmp.eq.s32.totalorder %s31, 7
      %p106 = por %p104, %p105
      %p108 = scmp.ne.s32.totalorder %s91, %s107
      %p109 = scmp.eq.s32.totalorder %s31, 0
      %p110 = por %p108, %p109
      %s112 = sadd.s32 %s111, 1
      %p115 = scmp.eq.s32.totalorder %s25, 7
      %p116 = scmp.ne.s32.totalorder %s111, %s113
      %p117 = scmp.eq.s32.totalorder %s25, 0
      %p118 = por %p116, %p117
      %p119 = scmp.ne.s32.totalorder %s111, %s113
      %p120 = scmp.eq.s32.totalorder %s30, 7
      %p121 = por %p119, %p120
      %p122 = scmp.ne.s32.totalorder %s113, %s114
      %p123 = scmp.eq.s32.totalorder %s30, 0
      %p124 = por %p122, %p123
      %p125 = scmp.ne.s32.totalorder %s113, %s114
      %p126 = scmp.eq.s32.totalorder %s31, 7
      %p127 = por %p125, %p126
      %p129 = scmp.ne.s32.totalorder %s114, %s128
      %p130 = scmp.eq.s32.totalorder %s31, 0
      %p131 = por %p129, %p130
      %s133 = sadd.s32 %s132, 1
      %p136 = scmp.eq.s32.totalorder %s25, 7
      %p137 = scmp.ne.s32.totalorder %s132, %s134
      %p138 = scmp.eq.s32.totalorder %s25, 0
      %p139 = por %p137, %p138
      %p140 = scmp.ne.s32.totalorder %s132, %s134
      %p141 = scmp.eq.s32.totalorder %s30, 7
      %p142 = por %p140, %p141
      %p143 = scmp.ne.s32.totalorder %s134, %s135
      %p144 = scmp.eq.s32.totalorder %s30, 0
      %p145 = por %p143, %p144
      %p146 = scmp.ne.s32.totalorder %s134, %s135
      %p147 = scmp.eq.s32.totalorder %s31, 7
      %p148 = por %p146, %p147
      %p150 = scmp.ne.s32.totalorder %s135, %s149
      %p151 = scmp.eq.s32.totalorder %s31, 0
      %p152 = por %p150, %p151
      %s154 = sadd.s32 %s153, 1
      %p157 = scmp.eq.s32.totalorder %s25, 7
      %p158 = scmp.ne.s32.totalorder %s153, %s155
      %p159 = scmp.eq.s32.totalorder %s25, 0
      %p160 = por %p158, %p159
      %p161 = scmp.ne.s32.totalorder %s153, %s155
      %p162 = scmp.eq.s32.totalorder %s30, 7
      %p163 = por %p161, %p162
      %p164 = scmp.ne.s32.totalorder %s155, %s156
      %p165 = scmp.eq.s32.totalorder %s30, 0
      %p166 = por %p164, %p165
      %p167 = scmp.ne.s32.totalorder %s155, %s156
      %p168 = scmp.eq.s32.totalorder %s31, 7
      %p169 = por %p167, %p168
      %p171 = scmp.ne.s32.totalorder %s156, %s170
      %p172 = scmp.eq.s32.totalorder %s31, 0
      %p173 = por %p171, %p172
      %s175 = sadd.s32 %s174, 1
      %p178 = scmp.eq.s32.totalorder %s25, 7
      %p179 = scmp.ne.s32.totalorder %s174, %s176
      %p180 = scmp.eq.s32.totalorder %s25, 0
      %p181 = por %p179, %p180
      %p182 = scmp.ne.s32.totalorder %s174, %s176
      %p183 = scmp.eq.s32.totalorder %s30, 7
      %p184 = por %p182, %p183
      %p185 = scmp.ne.s32.totalorder %s176, %s177
      %p186 = scmp.eq.s32.totalorder %s30, 0
      %p187 = por %p185, %p186
      %p188 = scmp.ne.s32.totalorder %s176, %s177
      %p189 = scmp.eq.s32.totalorder %s31, 7
      %p190 = por %p188, %p189
      %p192 = scmp.ne.s32.totalorder %s177, %s191
      %p193 = scmp.eq.s32.totalorder %s31, 0
      %p194 = por %p192, %p193
      %s196 = sadd.s32 %s195, 1
      %p199 = scmp.eq.s32.totalorder %s25, 7
      %p200 = scmp.ne.s32.totalorder %s195, %s197
      %p201 = scmp.eq.s32.totalorder %s25, 0
      %p202 = por %p200, %p201
      %p203 = scmp.ne.s32.totalorder %s195, %s197
      %p204 = scmp.eq.s32.totalorder %s30, 7
      %p205 = por %p203, %p204
      %p206 = scmp.ne.s32.totalorder %s197, %s198
      %p207 = scmp.eq.s32.totalorder %s30, 0
      %p208 = por %p206, %p207
      %p209 = scmp.ne.s32.totalorder %s197, %s198
      %p210 = scmp.eq.s32.totalorder %s31, 7
      %p211 = por %p209, %p210
      %p213 = scmp.ne.s32.totalorder %s198, %s212
      %p214 = scmp.eq.s32.totalorder %s31, 0
      %p215 = por %p213, %p214
      %s217 = sadd.s32 %s216, 1
      %p220 = scmp.eq.s32.totalorder %s25, 7
      %p221 = scmp.ne.s32.totalorder %s216, %s218
      %p222 = scmp.eq.s32.totalorder %s25, 0
      %p223 = por %p221, %p222
      %p224 = scmp.ne.s32.totalorder %s216, %s218
      %p225 = scmp.eq.s32.totalorder %s30, 7
      %p226 = por %p224, %p225
      %p227 = scmp.ne.s32.totalorder %s218, %s219
      %p228 = scmp.eq.s32.totalorder %s30, 0
      %p229 = por %p227, %p228
      %p230 = scmp.ne.s32.totalorder %s218, %s219
      %p231 = scmp.eq.s32.totalorder %s31, 7
      %p232 = por %p230, %p231
      %p234 = scmp.ne.s32.totalorder %s219, %s233
      %p235 = scmp.eq.s32.totalorder %s31, 0
      %p236 = por %p234, %p235
      %s238 = sadd.s32 %s237, 1
      %p241 = scmp.eq.s32.totalorder %s25, 7
      %p242 = scmp.ne.s32.totalorder %s237, %s239
      %p243 = scmp.eq.s32.totalorder %s25, 0
      %p244 = por %p242, %p243
      %p245 = scmp.ne.s32.totalorder %s237, %s239
      %p246 = scmp.eq.s32.totalorder %s30, 7
      %p247 = por %p245, %p246
      %p248 = scmp.ne.s32.totalorder %s239, %s240
      %p249 = scmp.eq.s32.totalorder %s30, 0
      %p250 = por %p248, %p249
      %p251 = scmp.ne.s32.totalorder %s239, %s240
      %p252 = scmp.eq.s32.totalorder %s31, 7
      %p253 = por %p251, %p252
      %p255 = scmp.ne.s32.totalorder %s240, %s254
      %p256 = scmp.eq.s32.totalorder %s31, 0
      %p257 = por %p255, %p256
      %s259 = sadd.s32 %s258, 1
      %p262 = scmp.eq.s32.totalorder %s25, 7
      %p263 = scmp.ne.s32.totalorder %s258, %s260
      %p264 = scmp.eq.s32.totalorder %s25, 0
      %p265 = por %p263, %p264
      %p266 = scmp.ne.s32.totalorder %s258, %s260
      %p267 = scmp.eq.s32.totalorder %s30, 7
      %p268 = por %p266, %p267
      %p269 = scmp.ne.s32.totalorder %s260, %s261
      %p270 = scmp.eq.s32.totalorder %s30, 0
      %p271 = por %p269, %p270
      %p272 = scmp.ne.s32.totalorder %s260, %s261
      %p273 = scmp.eq.s32.totalorder %s31, 7
      %p274 = por %p272, %p273
      %p276 = scmp.ne.s32.totalorder %s261, %s275
      %p277 = scmp.eq.s32.totalorder %s31, 0
      %p278 = por %p276, %p277
      %s279 = ssub.s32 %s25, %s32
      %p280 = scmp.eq.s32.totalorder %s279, 0
      %s282 = sadd.s32 %s281, 1
      %s283 = scalar_select %p280, %s281, %s282
      %p286 = pneg %p280
      %p287 = scmp.eq.s32.totalorder %s25, 7
      %p288 = por %p286, %p287
      %p289 = scmp.ne.s32.totalorder %s281, %s284
      %p290 = scmp.eq.s32.totalorder %s25, 0
      %p291 = por %p289, %p290
      %p292 = scmp.ne.s32.totalorder %s281, %s284
      %p293 = scmp.eq.s32.totalorder %s30, 7
      %p294 = por %p292, %p293
      %p295 = scmp.ne.s32.totalorder %s284, %s285
      %p296 = scmp.eq.s32.totalorder %s30, 0
      %p297 = por %p295, %p296
      %p298 = scmp.ne.s32.totalorder %s284, %s285
      %p299 = scmp.eq.s32.totalorder %s31, 7
      %p300 = por %p298, %p299
      %p302 = scmp.ne.s32.totalorder %s285, %s301
      %p303 = scmp.eq.s32.totalorder %s31, 0
      %p304 = por %p302, %p303
      %p305 = scmp.le.s32.totalorder 1, %s25
      %p306 = scmp.lt.s32.totalorder %s25, 9
      %p307 = pnand %p305, %p306
      %p308 = pneg %p307
      // Predicated region
      $region9: #{tpu_custom_call.1} parent=5 // pred_check
        _
      $region10: #{tpu_custom_call.1} parent=5 // pred_check_branch
        %310 = sbr.rel (%p307) target = $region12
      $region11: #{tpu_custom_call.1} parent=5 // pred_region
        %s311 = ssub.s32 %s25, 1
        // Predicated region
        $region13: #{tpu_custom_call.1} parent=11 // pred_check
          %p312 = pneg %p124
        $region14: #{tpu_custom_call.1} parent=11 // pred_check_branch
          %314 = sbr.rel (%p312) target = $region16
        $region15: #{tpu_custom_call.1} parent=11 // pred_region
          %s316 = ssub.s32 128, 128
          %317 = vsyncadd [#allocation6], %s316
          %s319 = sshll.u32 [#allocation5], 4
          %s320 = int_to_ptr.vmem [resolvable:$true] %s319
          %322 = dma.hbm_to_vmem [thread:$0]  %s3, 128, %s320, [#allocation6]
        $region16: #{tpu_custom_call.1} parent=11 // pred_fallthru
          _
        // Predicated region
        $region17: #{tpu_custom_call.1} parent=11 // pred_check
          %p323 = pneg %p145
        $region18: #{tpu_custom_call.1} parent=11 // pred_check_branch
          %325 = sbr.rel (%p323) target = $region20
        $region19: #{tpu_custom_call.1} parent=11 // pred_region
          _
        $region20: #{tpu_custom_call.1} parent=11 // pred_fallthru
          _
        // Predicated region
        $region21: #{tpu_custom_call.1} parent=11 // pred_check
          %p326 = pneg %p166
        $region22: #{tpu_custom_call.1} parent=11 // pred_check_branch
          %328 = sbr.rel (%p326) target = $region24
        $region23: #{tpu_custom_call.1} parent=11 // pred_region
          %s330 = ssub.s32 1152, 1152
          %331 = vsyncadd [#allocation6], %s330
          %s332 = sshll.u32 [#allocation7], 4
          %s333 = int_to_ptr.vmem [resolvable:$true] %s332
          %338 = dma.hbm_to_vmem [thread:$0]  %s5, 1152, %s333, [#allocation6], 128, 128, 8
        $region24: #{tpu_custom_call.1} parent=11 // pred_fallthru
          _
        // Predicated region
        $region25: #{tpu_custom_call.1} parent=11 // pred_check
          %p339 = pneg %p187
        $region26: #{tpu_custom_call.1} parent=11 // pred_check_branch
          %341 = sbr.rel (%p339) target = $region28
        $region27: #{tpu_custom_call.1} parent=11 // pred_region
          _
        $region28: #{tpu_custom_call.1} parent=11 // pred_fallthru
          _
        // Predicated region
        $region29: #{tpu_custom_call.1} parent=11 // pred_check
          %p342 = pneg %p208
        $region30: #{tpu_custom_call.1} parent=11 // pred_check_branch
          %344 = sbr.rel (%p342) target = $region32
        $region31: #{tpu_custom_call.1} parent=11 // pred_region
          _
        $region32: #{tpu_custom_call.1} parent=11 // pred_fallthru
          _
        // Predicated region
        $region33: #{tpu_custom_call.1} parent=11 // pred_check
          %p345 = pneg %p229
        $region34: #{tpu_custom_call.1} parent=11 // pred_check_branch
          %347 = sbr.rel (%p345) target = $region36
        $region35: #{tpu_custom_call.1} parent=11 // pred_region
          _
        $region36: #{tpu_custom_call.1} parent=11 // pred_fallthru
          _
        // Predicated region
        $region37: #{tpu_custom_call.1} parent=11 // pred_check
          %p348 = pneg %p250
        $region38: #{tpu_custom_call.1} parent=11 // pred_check_branch
          %350 = sbr.rel (%p348) target = $region40
        $region39: #{tpu_custom_call.1} parent=11 // pred_region
          %s352 = ssub.s32 1152, 1152
          %353 = vsyncadd [#allocation9], %s352
          %s354 = sshll.u32 [#allocation8], 4
          %s355 = int_to_ptr.vmem [resolvable:$true] %s354
          %360 = dma.hbm_to_vmem [thread:$0]  %s9, 1152, %s355, [#allocation9], 128, 128, 8
        $region40: #{tpu_custom_call.1} parent=11 // pred_fallthru
          _
        // Predicated region
        $region41: #{tpu_custom_call.1} parent=11 // pred_check
          %p361 = pneg %p271
        $region42: #{tpu_custom_call.1} parent=11 // pred_check_branch
          %363 = sbr.rel (%p361) target = $region44
        $region43: #{tpu_custom_call.1} parent=11 // pred_region
          _
        $region44: #{tpu_custom_call.1} parent=11 // pred_fallthru
          _
      $region12: #{tpu_custom_call.1} parent=5 // pred_fallthru
        _
      %p364 = scmp.lt.s32.totalorder %s25, 8
      // Predicated region
      $region45: #{tpu_custom_call.1} parent=5 // pred_check
        %p365 = pneg %p364
      $region46: #{tpu_custom_call.1} parent=5 // pred_check_branch
        %367 = sbr.rel (%p365) target = $region48
      $region47: #{tpu_custom_call.1} parent=5 // pred_region
        // Predicated region
        $region49: #{tpu_custom_call.1} parent=47 // pred_check
          %p368 = pneg %p45
        $region50: #{tpu_custom_call.1} parent=47 // pred_check_branch
          %370 = sbr.rel (%p368) target = $region52
        $region51: #{tpu_custom_call.1} parent=47 // pred_region
          %p371 = scmp.lt.s32.totalorder %s25, 7
          %s372 = scalar_select %p371, %s25, 7
          %s373 = smul.addr %s372, 2
          %s374 = smul.addr %s373, 8
          %s375 = scalar_lea.vmem %s0, %s374
        $region52: #{tpu_custom_call.1} parent=47 // pred_fallthru
          _
        // Predicated region
        $region53: #{tpu_custom_call.1} parent=47 // pred_check
          %p376 = pneg %p71
        $region54: #{tpu_custom_call.1} parent=47 // pred_check_branch
          %378 = sbr.rel (%p376) target = $region56
        $region55: #{tpu_custom_call.1} parent=47 // pred_region
          %p379 = scmp.lt.s32.totalorder %s25, 7
          %s380 = scalar_select %p379, %s25, 7
          %s381 = smul.addr %s380, 2
          %s382 = smul.addr %s381, 8
          %s383 = scalar_lea.vmem %s1, %s382
        $region56: #{tpu_custom_call.1} parent=47 // pred_fallthru
          _
        // Predicated region
        $region57: #{tpu_custom_call.1} parent=47 // pred_check
          %p384 = pneg %p97
        $region58: #{tpu_custom_call.1} parent=47 // pred_check_branch
          %386 = sbr.rel (%p384) target = $region60
        $region59: #{tpu_custom_call.1} parent=47 // pred_region
          %s387 = sand.u32 %s87, 1
          %s388 = scalar_lea.sflag [#allocation3], %s387
          %s389 = sand.u32 %s87, 1
          %s390 = smul.addr %s389, 2
          %s391 = scalar_lea.vmem [#allocation2], %s390
          %s393 = ssub.s32 32, 32
          %394 = vsyncadd %s388, %s393
          %s395 = smul.addr %s25, 32
          %s396 = scalar_lea.hbm %s2, %s395
          %s398 = sshll.u32 %s391, 4
          %s399 = int_to_ptr.vmem [resolvable:$true] %s398
          %401 = dma.hbm_to_vmem [thread:$0]  %s396, 32, %s399, %s388
        $region60: #{tpu_custom_call.1} parent=47 // pred_fallthru
          _
      $region48: #{tpu_custom_call.1} parent=5 // pred_fallthru
        _
      %p402 = scmp.le.s32.totalorder 1, %s25
      %p403 = scmp.lt.s32.totalorder %s25, 9
      %p404 = pnand %p402, %p403
      %p405 = pneg %p404
      // Predicated region
      $region61: #{tpu_custom_call.1} parent=5 // pred_check
        _
      $region62: #{tpu_custom_call.1} parent=5 // pred_check_branch
        %407 = sbr.rel (%p404) target = $region64
      $region63: #{tpu_custom_call.1} parent=5 // pred_region
        %s408 = ssub.s32 %s25, 1
        %s409 = sand.u32 %s90, 1
        %s410 = scalar_lea.sflag [#allocation3], %s409
        %s411 = sand.u32 %s90, 1
        %s412 = smul.addr %s411, 2
        %s413 = scalar_lea.vmem [#allocation2], %s412
        // Predicated region
        $region65: #{tpu_custom_call.1} parent=63 // pred_check
          %p414 = pneg %p103
        $region66: #{tpu_custom_call.1} parent=63 // pred_check_branch
          %416 = sbr.rel (%p414) target = $region68
        $region67: #{tpu_custom_call.1} parent=63 // pred_region
          %417 = dma.done %s410, 32
        $region68: #{tpu_custom_call.1} parent=63 // pred_fallthru
          _
        // Predicated region
        $region69: #{tpu_custom_call.1} parent=63 // pred_check
          %p418 = pneg %p124
        $region70: #{tpu_custom_call.1} parent=63 // pred_check_branch
          %420 = sbr.rel (%p418) target = $region72
        $region71: #{tpu_custom_call.1} parent=63 // pred_region
          %421 = dma.done [#allocation6], 128
        $region72: #{tpu_custom_call.1} parent=63 // pred_fallthru
          _
        // Predicated region
        $region73: #{tpu_custom_call.1} parent=63 // pred_check
          %p422 = pneg %p166
        $region74: #{tpu_custom_call.1} parent=63 // pred_check_branch
          %424 = sbr.rel (%p422) target = $region76
        $region75: #{tpu_custom_call.1} parent=63 // pred_region
          %425 = dma.done [#allocation6], 1152
        $region76: #{tpu_custom_call.1} parent=63 // pred_fallthru
          _
        // Predicated region
        $region77: #{tpu_custom_call.1} parent=63 // pred_check
          %p426 = pneg %p250
        $region78: #{tpu_custom_call.1} parent=63 // pred_check_branch
          %428 = sbr.rel (%p426) target = $region80
        $region79: #{tpu_custom_call.1} parent=63 // pred_region
          %429 = dma.done [#allocation9], 1152
        $region80: #{tpu_custom_call.1} parent=63 // pred_fallthru
          _
        %p430 = scmp.lt.s32.totalorder %s30, 7
        %s431 = scalar_select %p430, %s30, 7
        %s432 = smul.addr %s431, 2
        %s433 = smul.addr %s432, 8
        %s434 = scalar_lea.vmem %s0, %s433
        %p435 = pneg %p51
        %p436 = pneg %p48
        %p437 = scmp.lt.s32.totalorder %s30, 7
        %s438 = scalar_select %p437, %s30, 7
        %s439 = smul.addr %s438, 2
        %s440 = smul.addr %s439, 8
        %s441 = scalar_lea.vmem %s1, %s440
        %p442 = pneg %p77
        %p443 = pneg %p74
        %s444 = sand.u32 %s90, 1
        %s445 = scalar_lea.sflag [#allocation3], %s444
        %s446 = sand.u32 %s90, 1
        %s447 = smul.addr %s446, 2
        %s448 = scalar_lea.vmem [#allocation2], %s447
        %p449 = pneg %p103
        %p450 = pneg %p100
        %p451 = pneg %p124
        %p452 = pneg %p121
        %p453 = pneg %p145
        %p454 = pneg %p142
        %p455 = pneg %p166
        %p456 = pneg %p163
        %p457 = pneg %p187
        %p458 = pneg %p184
        %p459 = pneg %p208
        %p460 = pneg %p205
        %p461 = pneg %p229
        %p462 = pneg %p226
        %p463 = pneg %p250
        %p464 = pneg %p247
        %p465 = pneg %p271
        %p466 = pneg %p268
        %p467 = pneg %p297
        %p468 = pneg %p294
        %s469 = sand.u32 %s284, 1
        %s470 = scalar_lea.sflag [#allocation4], %s469
        %s471 = sand.u32 %s284, 1
        %s472 = smul.addr %s471, 2
        %s473 = scalar_lea.vmem [#allocation10], %s472
        %p474 = scmp.lt.s32.totalorder %s30, 7
        %s475 = scalar_select %p474, %s30, 7
        %s476 = smul.addr %s475, 2
        %s477 = smul.addr %s476, 8
        %s478 = scalar_lea.vmem %s0, %s477
        %p479 = scmp.lt.s32.totalorder %s30, 7
        %s480 = scalar_select %p479, %s30, 7
        %s481 = smul.addr %s480, 2
        %s482 = smul.addr %s481, 8
        %s483 = scalar_lea.vmem %s1, %s482
        %v484 = vld [vmem:[%s478] sm:$0xff]
        %v485 = vld [vmem:[%s478 + $0x8] sm:$0xff]
        %v486 = vld [vmem:[%s483] sm:$0xff]
        %v487 = vld [vmem:[%s483 + $0x8] sm:$0xff]
        %v488 = vld [vmem:[%s413] sm:$0x3]
        %v489 = vld [vmem:[#allocation5] sm:$0xff]
        %v490 = vld [vmem:[%s4] sm:$0x1]
        %vm491 = vcmask 64512
        %v493 = vsel %vm491, %v484, 0
        %v496 = vsel %vm491, %v485, 0
        %498 = vmatprep.subr.mxu0 0.0
        %499 = vmatpush1.msra.mxu0 0.0
        %500 = vmatprep.subr.mxu0 0.0
        %501 = vmatpush1.msra.mxu0 0.0
        %502 = vmatprep.subr.mxu0 0.0
        %503 = vmatpush1.msra.mxu0 0.0
        %504 = vmatprep.subr.mxu0 0.0
        %505 = vmatpush1.msra.mxu0 0.0
        %506 = vmatprep.subr.mxu0 0.0
        %507 = vmatpush1.msra.mxu0 0.0
        %508 = vmatprep.subr.mxu0 0.0
        %509 = vmatpush1.msra.mxu0 0.0
        %510 = vmatprep.subr.mxu0 0.0
        %511 = vmatpush1.msra.mxu0 0.0
        %512 = vmatprep.subr.mxu0 0.0
        %513 = vmatpush1.msra.mxu0 0.0
        %514 = vmatprep.subr.mxu0 0.0
        %515 = vmatpush1.msra.mxu0 0.0
        %516 = vmatprep.subr.mxu0 0.0
        %517 = vmatpush1.msra.mxu0 0.0
        %518 = vmatprep.subr.mxu0 0.0
        %519 = vmatpush1.msra.mxu0 0.0
        %520 = vmatprep.subr.mxu0 0.0
        %521 = vmatpush1.msra.mxu0 0.0
        %522 = vmatprep.subr.mxu0 0.0
        %523 = vmatpush1.msra.mxu0 0.0
        %524 = vmatprep.subr.mxu0 0.0
        %525 = vmatpush1.msra.mxu0 0.0
        %526 = vmatprep.subr.mxu0 0.0
        %527 = vmatpush1.msra.mxu0 0.0
        %528 = vmatprep.subr.mxu0 0.0
        %529 = vmatpush1.msra.mxu0 %v489
        %530 = vmatprep.subr.mxu0 0.0
        %531 = vmatpush2.msra.mxu0 0.0
        %532 = vmatprep.subr.mxu0 0.0
        %533 = vmatpush2.msra.mxu0 0.0
        %534 = vmatprep.subr.mxu0 0.0
        %535 = vmatpush2.msra.mxu0 0.0
        %536 = vmatprep.subr.mxu0 0.0
        %537 = vmatpush2.msra.mxu0 0.0
        %538 = vmatprep.subr.mxu0 0.0
        %539 = vmatpush2.msra.mxu0 0.0
        %540 = vmatprep.subr.mxu0 0.0
        %541 = vmatpush2.msra.mxu0 0.0
        %542 = vmatprep.subr.mxu0 0.0
        %543 = vmatpush2.msra.mxu0 0.0
        %544 = vmatprep.subr.mxu0 0.0
        %545 = vmatpush2.msra.mxu0 0.0
        %546 = vmatprep.subr.mxu0 0.0
        %547 = vmatpush2.msra.mxu0 0.0
        %548 = vmatprep.subr.mxu0 0.0
        %549 = vmatpush2.msra.mxu0 0.0
        %550 = vmatprep.subr.mxu0 0.0
        %551 = vmatpush2.msra.mxu0 0.0
        %552 = vmatprep.subr.mxu0 0.0
        %553 = vmatpush2.msra.mxu0 0.0
        %554 = vmatprep.subr.mxu0 0.0
        %555 = vmatpush2.msra.mxu0 0.0
        %556 = vmatprep.subr.mxu0 0.0
        %557 = vmatpush2.msra.mxu0 0.0
        %558 = vmatprep.subr.mxu0 0.0
        %559 = vmatpush2.msra.mxu0 0.0
        %560 = vmatprep.subr.mxu0 0.0
        %561 = vmatpush2.msra.mxu0 0.0
        %562 = vmatprep.mubr.f32.mxu0 0.0
        %563 = vmatmul.mubr.f32.gmra.mxu0 %v493
        %v564 = vpop.f32.mrf.mxu0
        %v565 = vadd.f32 0.0, %v564
        %v566 = vpop.f32.mrf.mxu0
        %567 = vmatprep.mubr.f32.mxu0 0.0
        %568 = vmatmul.mubr.f32.gmra.mxu0 %v496
        %v569 = vpop.f32.mrf.mxu0
        %v570 = vadd.f32 0.0, %v569
        %v571 = vpop.f32.mrf.mxu0
        %572 = vdwg.mxu0
        %575 = vrot.lane.b32.xlu0 %v565, 64
        %v576 = vpop.permute.xlu0 %575
        %577 = vrot.lane.b32.xlu0 %v570, 64
        %v578 = vpop.permute.xlu0 %577
        %581 = vxpose.xlu0.b32.start [1/16] %v576, 128
        %582 = vxpose.xlu0.b32.cont [2/16] %v578, 128
        %583 = vxpose.xlu0.b32.cont [3/16] 0.0, 128
        %584 = vxpose.xlu0.b32.cont [4/16] 0.0, 128
        %585 = vxpose.xlu0.b32.cont [5/16] 0.0, 128
        %586 = vxpose.xlu0.b32.cont [6/16] 0.0, 128
        %587 = vxpose.xlu0.b32.cont [7/16] 0.0, 128
        %588 = vxpose.xlu0.b32.cont [8/16] 0.0, 128
        %589 = vxpose.xlu0.b32.cont [9/16] 0.0, 128
        %590 = vxpose.xlu0.b32.cont [10/16] 0.0, 128
        %591 = vxpose.xlu0.b32.cont [11/16] 0.0, 128
        %592 = vxpose.xlu0.b32.cont [12/16] 0.0, 128
        %593 = vxpose.xlu0.b32.cont [13/16] 0.0, 128
        %594 = vxpose.xlu0.b32.cont [14/16] 0.0, 128
        %595 = vxpose.xlu0.b32.cont [15/16] 0.0, 128
        %596 = vxpose.xlu0.b32.end [16/16] 0.0, 128
        %v597 = vpop.trf.xlu0
        %v598 = vpop.trf.xlu0
        %v599 = vpop.trf.xlu0
        %v600 = vpop.trf.xlu0
        %v601 = vpop.trf.xlu0
        %v602 = vpop.trf.xlu0
        %v603 = vpop.trf.xlu0
        %v604 = vpop.trf.xlu0
        %v605 = vpop.trf.xlu0
        %v606 = vpop.trf.xlu0
        %v607 = vpop.trf.xlu0
        %v608 = vpop.trf.xlu0
        %v609 = vpop.trf.xlu0
        %v610 = vpop.trf.xlu0
        %v611 = vpop.trf.xlu0
        %v612 = vpop.trf.xlu0
        %613 = vset.pattern.permute.xlu0 65
        %614 = vperm.xlu0 %613, %v565
        %v615 = vpop.permute.xlu0 %614
        %617 = vset.pattern.permute.xlu0 65
        %618 = vperm.xlu0 %617, %v570
        %v619 = vpop.permute.xlu0 %618
        %v621 = vlaneseq
        %v622 = vshrl.u32 %v621, 7
        %v623 = vsub.s32 0, %v622
        %v624 = vrot.slane %v597, %v623
        %v625 = vadd.f32 %v615, %v624
        %v626 = vadd.f32 %v619, %v624
        %vm627 = vcmp.gt.f32.partialorder %v625, 0.0
        %vm628 = vcmp.gt.f32.partialorder %v626, 0.0
        %v629 = vmul.f32 %v625, 0.2
        %v630 = vmul.f32 %v626, 0.2
        %v631 = vsel %vm627, %v625, %v629
        %v632 = vsel %vm628, %v626, %v630
        %vm633 = vcmp.gt.f32.partialorder %v486, 0.0
        %vm634 = vcmp.gt.f32.partialorder %v487, 0.0
        %v635 = vsel %vm633, %v631, -1e+30
        %v636 = vsel %vm634, %v632, -1e+30
        %vm637 = vcmask 130048
        %v638 = vsel %vm637, %v635, -inf
        %639 = vmax.xlane.f32.xlu0 %v638
        %v640 = vpop.xlane.xlu0 %639
        %v641 = vsel %vm637, %v636, -inf
        %642 = vmax.xlane.f32.xlu0 %v641
        %v643 = vpop.xlane.xlu0 %642
        %v644 = vsub.f32 %v635, %v640
        %v645 = vsub.f32 %v636, %v643
        %v646 = vmul.f32 %v644, 1.442695
        %v647 = vpow.pop %v646
        %v648 = vmul.f32 %v645, 1.442695
        %v649 = vpow.pop %v648
        %v650 = vmul.f32 %v647, %v486
        %v651 = vmul.f32 %v649, %v487
        %v652 = vsel %vm637, %v650, 0.0
        %653 = vadd.xlane.f32.xlu0 %v652
        %v654 = vpop.xlane.xlu0 %653
        %v655 = vsel %vm637, %v651, 0.0
        %656 = vadd.xlane.f32.xlu0 %v655
        %v657 = vpop.xlane.xlu0 %656
        %v658 = vrcp.pop %v654
        %v659 = vrcp.pop %v657
        %v660 = vmul.f32 %v650, %v658
        %v661 = vmul.f32 %v651, %v659
        %v663 = vlaneseq
        %v664 = vshrl.u32 %v663, 7
        %v665 = vsub.s32 0, %v664
        %v666 = vrot.slane %v490, %v665
        %v669 = vsel %vm637, %v660, 0
        %v672 = vsel %vm637, %v661, 0
        %674 = vmatprep.subr.mxu0 0.0
        %675 = vmatpush1.msra.mxu0 0.0
        %676 = vmatprep.subr.mxu0 0.0
        %677 = vmatpush1.msra.mxu0 0.0
        %678 = vmatprep.subr.mxu0 0.0
        %679 = vmatpush1.msra.mxu0 0.0
        %680 = vmatprep.subr.mxu0 0.0
        %681 = vmatpush1.msra.mxu0 0.0
        %682 = vmatprep.subr.mxu0 0.0
        %683 = vmatpush1.msra.mxu0 0.0
        %684 = vmatprep.subr.mxu0 0.0
        %685 = vmatpush1.msra.mxu0 0.0
        %686 = vmatprep.subr.mxu0 0.0
        %687 = vmatpush1.msra.mxu0 0.0
        %688 = vmatprep.subr.mxu0 0.0
        %689 = vmatpush1.msra.mxu0 0.0
        %690 = vmatprep.subr.mxu0 0.0
        %691 = vmatpush1.msra.mxu0 0.0
        %692 = vmatprep.subr.mxu0 0.0
        %693 = vmatpush1.msra.mxu0 0.0
        %694 = vmatprep.subr.mxu0 0.0
        %695 = vmatpush1.msra.mxu0 0.0
        %696 = vmatprep.subr.mxu0 0.0
        %697 = vmatpush1.msra.mxu0 0.0
        %698 = vmatprep.subr.mxu0 0.0
        %699 = vmatpush1.msra.mxu0 0.0
        %700 = vmatprep.subr.mxu0 0.0
        %701 = vmatpush1.msra.mxu0 0.0
        %702 = vmatprep.subr.mxu0 0.0
        %703 = vmatpush1.msra.mxu0 %v570
        %704 = vmatprep.subr.mxu0 0.0
        %705 = vmatpush1.msra.mxu0 %v565
        %706 = vmatprep.subr.mxu0 0.0
        %707 = vmatpush2.msra.mxu0 0.0
        %708 = vmatprep.subr.mxu0 0.0
        %709 = vmatpush2.msra.mxu0 0.0
        %710 = vmatprep.subr.mxu0 0.0
        %711 = vmatpush2.msra.mxu0 0.0
        %712 = vmatprep.subr.mxu0 0.0
        %713 = vmatpush2.msra.mxu0 0.0
        %714 = vmatprep.subr.mxu0 0.0
        %715 = vmatpush2.msra.mxu0 0.0
        %716 = vmatprep.subr.mxu0 0.0
        %717 = vmatpush2.msra.mxu0 0.0
        %718 = vmatprep.subr.mxu0 0.0
        %719 = vmatpush2.msra.mxu0 0.0
        %720 = vmatprep.subr.mxu0 0.0
        %721 = vmatpush2.msra.mxu0 0.0
        %722 = vmatprep.subr.mxu0 0.0
        %723 = vmatpush2.msra.mxu0 0.0
        %724 = vmatprep.subr.mxu0 0.0
        %725 = vmatpush2.msra.mxu0 0.0
        %726 = vmatprep.subr.mxu0 0.0
        %727 = vmatpush2.msra.mxu0 0.0
        %728 = vmatprep.subr.mxu0 0.0
        %729 = vmatpush2.msra.mxu0 0.0
        %730 = vmatprep.subr.mxu0 0.0
        %731 = vmatpush2.msra.mxu0 0.0
        %732 = vmatprep.subr.mxu0 0.0
        %733 = vmatpush2.msra.mxu0 0.0
        %734 = vmatprep.subr.mxu0 0.0
        %735 = vmatpush2.msra.mxu0 0.0
        %736 = vmatprep.subr.mxu0 0.0
        %737 = vmatpush2.msra.mxu0 0.0
        %738 = vmatprep.mubr.f32.mxu0 0.0
        %739 = vmatmul.mubr.f32.gmra.mxu0 %v669
        %v740 = vpop.f32.mrf.mxu0
        %v741 = vadd.f32 %v666, %v740
        %v742 = vpop.f32.mrf.mxu0
        %743 = vmatprep.mubr.f32.mxu0 0.0
        %744 = vmatmul.mubr.f32.gmra.mxu0 %v672
        %v745 = vpop.f32.mrf.mxu0
        %v746 = vadd.f32 %v666, %v745
        %v747 = vpop.f32.mrf.mxu0
        %748 = vdwg.mxu0
        %v749 = vmax.f32 %v741, 0.0
        %v750 = vmax.f32 %v746, 0.0
        %v751 = vld [vmem:[#allocation7] sm:$0xff]
        %v752 = vld [vmem:[#allocation7 + $0x8] sm:$0xff]
        %v753 = vld [vmem:[#allocation7 + $0x10] sm:$0xff]
        %v754 = vld [vmem:[#allocation7 + $0x18] sm:$0xff]
        %v755 = vld [vmem:[#allocation7 + $0x20] sm:$0xff]
        %v756 = vld [vmem:[#allocation7 + $0x28] sm:$0xff]
        %v757 = vld [vmem:[#allocation7 + $0x30] sm:$0xff]
        %v758 = vld [vmem:[#allocation7 + $0x38] sm:$0xff]
        %v759 = vld [vmem:[#allocation7 + $0x40] sm:$0x3]
        %v760 = vld [vmem:[%s6] sm:$0x1]
        %vm761 = vcmask 539648
        %v763 = vsel %vm761, %v749, 0
        %v766 = vsel %vm761, %v750, 0
        %vm768 = vcmask 1041408
        %v770 = vsel %vm768, %v759, 0
        %772 = vmatprep.subr.mxu0 0.0
        %773 = vmatpush1.msra.mxu0 0.0
        %774 = vmatprep.subr.mxu0 0.0
        %775 = vmatpush1.msra.mxu0 0.0
        %776 = vmatprep.subr.mxu0 0.0
        %777 = vmatpush1.msra.mxu0 0.0
        %778 = vmatprep.subr.mxu0 0.0
        %779 = vmatpush1.msra.mxu0 0.0
        %780 = vmatprep.subr.mxu0 0.0
        %781 = vmatpush1.msra.mxu0 0.0
        %782 = vmatprep.subr.mxu0 0.0
        %783 = vmatpush1.msra.mxu0 0.0
        %784 = vmatprep.subr.mxu0 0.0
        %785 = vmatpush1.msra.mxu0 0.0
        %786 = vmatprep.subr.mxu0 0.0
        %787 = vmatpush1.msra.mxu0 %v770
        %788 = vmatprep.subr.mxu0 0.0
        %789 = vmatpush1.msra.mxu0 %v758
        %790 = vmatprep.subr.mxu0 0.0
        %791 = vmatpush1.msra.mxu0 %v757
        %792 = vmatprep.subr.mxu0 0.0
        %793 = vmatpush1.msra.mxu0 %v756
        %794 = vmatprep.subr.mxu0 0.0
        %795 = vmatpush1.msra.mxu0 %v755
        %796 = vmatprep.subr.mxu0 0.0
        %797 = vmatpush1.msra.mxu0 %v754
        %798 = vmatprep.subr.mxu0 0.0
        %799 = vmatpush1.msra.mxu0 %v753
        %800 = vmatprep.subr.mxu0 0.0
        %801 = vmatpush1.msra.mxu0 %v752
        %802 = vmatprep.subr.mxu0 0.0
        %803 = vmatpush1.msra.mxu0 %v751
        %804 = vmatprep.subr.mxu0 0.0
        %805 = vmatpush2.msra.mxu0 0.0
        %806 = vmatprep.subr.mxu0 0.0
        %807 = vmatpush2.msra.mxu0 0.0
        %808 = vmatprep.subr.mxu0 0.0
        %809 = vmatpush2.msra.mxu0 0.0
        %810 = vmatprep.subr.mxu0 0.0
        %811 = vmatpush2.msra.mxu0 0.0
        %812 = vmatprep.subr.mxu0 0.0
        %813 = vmatpush2.msra.mxu0 0.0
        %814 = vmatprep.subr.mxu0 0.0
        %815 = vmatpush2.msra.mxu0 0.0
        %816 = vmatprep.subr.mxu0 0.0
        %817 = vmatpush2.msra.mxu0 0.0
        %818 = vmatprep.subr.mxu0 0.0
        %819 = vmatpush2.msra.mxu0 0.0
        %820 = vmatprep.subr.mxu0 0.0
        %821 = vmatpush2.msra.mxu0 0.0
        %822 = vmatprep.subr.mxu0 0.0
        %823 = vmatpush2.msra.mxu0 0.0
        %824 = vmatprep.subr.mxu0 0.0
        %825 = vmatpush2.msra.mxu0 0.0
        %826 = vmatprep.subr.mxu0 0.0
        %827 = vmatpush2.msra.mxu0 0.0
        %828 = vmatprep.subr.mxu0 0.0
        %829 = vmatpush2.msra.mxu0 0.0
        %830 = vmatprep.subr.mxu0 0.0
        %831 = vmatpush2.msra.mxu0 0.0
        %832 = vmatprep.subr.mxu0 0.0
        %833 = vmatpush2.msra.mxu0 0.0
        %834 = vmatprep.subr.mxu0 0.0
        %835 = vmatpush2.msra.mxu0 0.0
        %836 = vmatprep.mubr.f32.mxu0 0.0
        %837 = vmatmul.mubr.f32.gmra.mxu0 %v763
        %v838 = vpop.f32.mrf.mxu0
        %v839 = vadd.f32 0.0, %v838
        %v840 = vpop.f32.mrf.mxu0
        %841 = vmatprep.mubr.f32.mxu0 0.0
        %842 = vmatmul.mubr.f32.gmra.mxu0 %v766
        %v843 = vpop.f32.mrf.mxu0
        %v844 = vadd.f32 0.0, %v843
        %v845 = vpop.f32.mrf.mxu0
        %846 = vdwg.mxu0
        %849 = vrot.lane.b32.xlu0 %v839, 64
        %v850 = vpop.permute.xlu0 %849
        %851 = vrot.lane.b32.xlu0 %v844, 64
        %v852 = vpop.permute.xlu0 %851
        %855 = vxpose.xlu0.b32.start [1/16] %v850, 128
        %856 = vxpose.xlu0.b32.cont [2/16] %v852, 128
        %857 = vxpose.xlu0.b32.cont [3/16] 0.0, 128
        %858 = vxpose.xlu0.b32.cont [4/16] 0.0, 128
        %859 = vxpose.xlu0.b32.cont [5/16] 0.0, 128
        %860 = vxpose.xlu0.b32.cont [6/16] 0.0, 128
        %861 = vxpose.xlu0.b32.cont [7/16] 0.0, 128
        %862 = vxpose.xlu0.b32.cont [8/16] 0.0, 128
        %863 = vxpose.xlu0.b32.cont [9/16] 0.0, 128
        %864 = vxpose.xlu0.b32.cont [10/16] 0.0, 128
        %865 = vxpose.xlu0.b32.cont [11/16] 0.0, 128
        %866 = vxpose.xlu0.b32.cont [12/16] 0.0, 128
        %867 = vxpose.xlu0.b32.cont [13/16] 0.0, 128
        %868 = vxpose.xlu0.b32.cont [14/16] 0.0, 128
        %869 = vxpose.xlu0.b32.cont [15/16] 0.0, 128
        %870 = vxpose.xlu0.b32.end [16/16] 0.0, 128
        %v871 = vpop.trf.xlu0
        %v872 = vpop.trf.xlu0
        %v873 = vpop.trf.xlu0
        %v874 = vpop.trf.xlu0
        %v875 = vpop.trf.xlu0
        %v876 = vpop.trf.xlu0
        %v877 = vpop.trf.xlu0
        %v878 = vpop.trf.xlu0
        %v879 = vpop.trf.xlu0
        %v880 = vpop.trf.xlu0
        %v881 = vpop.trf.xlu0
        %v882 = vpop.trf.xlu0
        %v883 = vpop.trf.xlu0
        %v884 = vpop.trf.xlu0
        %v885 = vpop.trf.xlu0
        %v886 = vpop.trf.xlu0
        %887 = vset.pattern.permute.xlu0 65
        %888 = vperm.xlu0 %887, %v839
        %v889 = vpop.permute.xlu0 %888
        %891 = vset.pattern.permute.xlu0 65
        %892 = vperm.xlu0 %891, %v844
        %v893 = vpop.permute.xlu0 %892
        %v895 = vlaneseq
        %v896 = vshrl.u32 %v895, 7
        %v897 = vsub.s32 0, %v896
        %v898 = vrot.slane %v871, %v897
        %v899 = vadd.f32 %v889, %v898
        %v900 = vadd.f32 %v893, %v898
        %vm901 = vcmp.gt.f32.partialorder %v899, 0.0
        %vm902 = vcmp.gt.f32.partialorder %v900, 0.0
        %v903 = vmul.f32 %v899, 0.2
        %v904 = vmul.f32 %v900, 0.2
        %v905 = vsel %vm901, %v899, %v903
        %v906 = vsel %vm902, %v900, %v904
        %v907 = vsel %vm633, %v905, -1e+30
        %v908 = vsel %vm634, %v906, -1e+30
        %v909 = vsel %vm637, %v907, -inf
        %910 = vmax.xlane.f32.xlu0 %v909
        %v911 = vpop.xlane.xlu0 %910
        %v912 = vsel %vm637, %v908, -inf
        %913 = vmax.xlane.f32.xlu0 %v912
        %v914 = vpop.xlane.xlu0 %913
        %v915 = vsub.f32 %v907, %v911
        %v916 = vsub.f32 %v908, %v914
        %v917 = vmul.f32 %v915, 1.442695
        %v918 = vpow.pop %v917
        %v919 = vmul.f32 %v916, 1.442695
        %v920 = vpow.pop %v919
        %v921 = vmul.f32 %v918, %v486
        %v922 = vmul.f32 %v920, %v487
        %v923 = vsel %vm637, %v921, 0.0
        %924 = vadd.xlane.f32.xlu0 %v923
        %v925 = vpop.xlane.xlu0 %924
        %v926 = vsel %vm637, %v922, 0.0
        %927 = vadd.xlane.f32.xlu0 %v926
        %v928 = vpop.xlane.xlu0 %927
        %v929 = vrcp.pop %v925
        %v930 = vrcp.pop %v928
        %v931 = vmul.f32 %v921, %v929
        %v932 = vmul.f32 %v922, %v930
        %v934 = vlaneseq
        %v935 = vshrl.u32 %v934, 7
        %v936 = vsub.s32 0, %v935
        %v937 = vrot.slane %v760, %v936
        %v940 = vsel %vm637, %v931, 0
        %v943 = vsel %vm637, %v932, 0
        %945 = vmatprep.subr.mxu0 0.0
        %946 = vmatpush1.msra.mxu0 0.0
        %947 = vmatprep.subr.mxu0 0.0
        %948 = vmatpush1.msra.mxu0 0.0
        %949 = vmatprep.subr.mxu0 0.0
        %950 = vmatpush1.msra.mxu0 0.0
        %951 = vmatprep.subr.mxu0 0.0
        %952 = vmatpush1.msra.mxu0 0.0
        %953 = vmatprep.subr.mxu0 0.0
        %954 = vmatpush1.msra.mxu0 0.0
        %955 = vmatprep.subr.mxu0 0.0
        %956 = vmatpush1.msra.mxu0 0.0
        %957 = vmatprep.subr.mxu0 0.0
        %958 = vmatpush1.msra.mxu0 0.0
        %959 = vmatprep.subr.mxu0 0.0
        %960 = vmatpush1.msra.mxu0 0.0
        %961 = vmatprep.subr.mxu0 0.0
        %962 = vmatpush1.msra.mxu0 0.0
        %963 = vmatprep.subr.mxu0 0.0
        %964 = vmatpush1.msra.mxu0 0.0
        %965 = vmatprep.subr.mxu0 0.0
        %966 = vmatpush1.msra.mxu0 0.0
        %967 = vmatprep.subr.mxu0 0.0
        %968 = vmatpush1.msra.mxu0 0.0
        %969 = vmatprep.subr.mxu0 0.0
        %970 = vmatpush1.msra.mxu0 0.0
        %971 = vmatprep.subr.mxu0 0.0
        %972 = vmatpush1.msra.mxu0 0.0
        %973 = vmatprep.subr.mxu0 0.0
        %974 = vmatpush1.msra.mxu0 %v844
        %975 = vmatprep.subr.mxu0 0.0
        %976 = vmatpush1.msra.mxu0 %v839
        %977 = vmatprep.subr.mxu0 0.0
        %978 = vmatpush2.msra.mxu0 0.0
        %979 = vmatprep.subr.mxu0 0.0
        %980 = vmatpush2.msra.mxu0 0.0
        %981 = vmatprep.subr.mxu0 0.0
        %982 = vmatpush2.msra.mxu0 0.0
        %983 = vmatprep.subr.mxu0 0.0
        %984 = vmatpush2.msra.mxu0 0.0
        %985 = vmatprep.subr.mxu0 0.0
        %986 = vmatpush2.msra.mxu0 0.0
        %987 = vmatprep.subr.mxu0 0.0
        %988 = vmatpush2.msra.mxu0 0.0
        %989 = vmatprep.subr.mxu0 0.0
        %990 = vmatpush2.msra.mxu0 0.0
        %991 = vmatprep.subr.mxu0 0.0
        %992 = vmatpush2.msra.mxu0 0.0
        %993 = vmatprep.subr.mxu0 0.0
        %994 = vmatpush2.msra.mxu0 0.0
        %995 = vmatprep.subr.mxu0 0.0
        %996 = vmatpush2.msra.mxu0 0.0
        %997 = vmatprep.subr.mxu0 0.0
        %998 = vmatpush2.msra.mxu0 0.0
        %999 = vmatprep.subr.mxu0 0.0
        %1000 = vmatpush2.msra.mxu0 0.0
        %1001 = vmatprep.subr.mxu0 0.0
        %1002 = vmatpush2.msra.mxu0 0.0
        %1003 = vmatprep.subr.mxu0 0.0
        %1004 = vmatpush2.msra.mxu0 0.0
        %1005 = vmatprep.subr.mxu0 0.0
        %1006 = vmatpush2.msra.mxu0 0.0
        %1007 = vmatprep.subr.mxu0 0.0
        %1008 = vmatpush2.msra.mxu0 0.0
        %1009 = vmatprep.mubr.f32.mxu0 0.0
        %1010 = vmatmul.mubr.f32.gmra.mxu0 %v940
        %v1011 = vpop.f32.mrf.mxu0
        %v1012 = vadd.f32 %v937, %v1011
        %v1013 = vpop.f32.mrf.mxu0
        %1014 = vmatprep.mubr.f32.mxu0 0.0
        %1015 = vmatmul.mubr.f32.gmra.mxu0 %v943
        %v1016 = vpop.f32.mrf.mxu0
        %v1017 = vadd.f32 %v937, %v1016
        %v1018 = vpop.f32.mrf.mxu0
        %1019 = vdwg.mxu0
        %v1020 = vmax.f32 %v1012, 0.0
        %v1021 = vmax.f32 %v1017, 0.0
        %v1022 = vld [vmem:[%s7] sm:$0xff]
        %v1023 = vld [vmem:[%s7 + $0x8] sm:$0xff]
        %v1024 = vld [vmem:[%s7 + $0x10] sm:$0xff]
        %v1025 = vld [vmem:[%s7 + $0x18] sm:$0xff]
        %v1026 = vld [vmem:[%s7 + $0x20] sm:$0xff]
        %v1027 = vld [vmem:[%s7 + $0x28] sm:$0xff]
        %v1028 = vld [vmem:[%s7 + $0x30] sm:$0xff]
        %v1029 = vld [vmem:[%s7 + $0x38] sm:$0xff]
        %v1030 = vld [vmem:[%s7 + $0x40] sm:$0x3]
        %v1031 = vld [vmem:[%s8] sm:$0x1]
        %v1033 = vsel %vm761, %v1020, 0
        %v1036 = vsel %vm761, %v1021, 0
        %v1039 = vsel %vm768, %v1030, 0
        %1041 = vmatprep.subr.mxu0 0.0
        %1042 = vmatpush1.msra.mxu0 0.0
        %1043 = vmatprep.subr.mxu0 0.0
        %1044 = vmatpush1.msra.mxu0 0.0
        %1045 = vmatprep.subr.mxu0 0.0
        %1046 = vmatpush1.msra.mxu0 0.0
        %1047 = vmatprep.subr.mxu0 0.0
        %1048 = vmatpush1.msra.mxu0 0.0
        %1049 = vmatprep.subr.mxu0 0.0
        %1050 = vmatpush1.msra.mxu0 0.0
        %1051 = vmatprep.subr.mxu0 0.0
        %1052 = vmatpush1.msra.mxu0 0.0
        %1053 = vmatprep.subr.mxu0 0.0
        %1054 = vmatpush1.msra.mxu0 0.0
        %1055 = vmatprep.subr.mxu0 0.0
        %1056 = vmatpush1.msra.mxu0 %v1039
        %1057 = vmatprep.subr.mxu0 0.0
        %1058 = vmatpush1.msra.mxu0 %v1029
        %1059 = vmatprep.subr.mxu0 0.0
        %1060 = vmatpush1.msra.mxu0 %v1028
        %1061 = vmatprep.subr.mxu0 0.0
        %1062 = vmatpush1.msra.mxu0 %v1027
        %1063 = vmatprep.subr.mxu0 0.0
        %1064 = vmatpush1.msra.mxu0 %v1026
        %1065 = vmatprep.subr.mxu0 0.0
        %1066 = vmatpush1.msra.mxu0 %v1025
        %1067 = vmatprep.subr.mxu0 0.0
        %1068 = vmatpush1.msra.mxu0 %v1024
        %1069 = vmatprep.subr.mxu0 0.0
        %1070 = vmatpush1.msra.mxu0 %v1023
        %1071 = vmatprep.subr.mxu0 0.0
        %1072 = vmatpush1.msra.mxu0 %v1022
        %1073 = vmatprep.subr.mxu0 0.0
        %1074 = vmatpush2.msra.mxu0 0.0
        %1075 = vmatprep.subr.mxu0 0.0
        %1076 = vmatpush2.msra.mxu0 0.0
        %1077 = vmatprep.subr.mxu0 0.0
        %1078 = vmatpush2.msra.mxu0 0.0
        %1079 = vmatprep.subr.mxu0 0.0
        %1080 = vmatpush2.msra.mxu0 0.0
        %1081 = vmatprep.subr.mxu0 0.0
        %1082 = vmatpush2.msra.mxu0 0.0
        %1083 = vmatprep.subr.mxu0 0.0
        %1084 = vmatpush2.msra.mxu0 0.0
        %1085 = vmatprep.subr.mxu0 0.0
        %1086 = vmatpush2.msra.mxu0 0.0
        %1087 = vmatprep.subr.mxu0 0.0
        %1088 = vmatpush2.msra.mxu0 0.0
        %1089 = vmatprep.subr.mxu0 0.0
        %1090 = vmatpush2.msra.mxu0 0.0
        %1091 = vmatprep.subr.mxu0 0.0
        %1092 = vmatpush2.msra.mxu0 0.0
        %1093 = vmatprep.subr.mxu0 0.0
        %1094 = vmatpush2.msra.mxu0 0.0
        %1095 = vmatprep.subr.mxu0 0.0
        %1096 = vmatpush2.msra.mxu0 0.0
        %1097 = vmatprep.subr.mxu0 0.0
        %1098 = vmatpush2.msra.mxu0 0.0
        %1099 = vmatprep.subr.mxu0 0.0
        %1100 = vmatpush2.msra.mxu0 0.0
        %1101 = vmatprep.subr.mxu0 0.0
        %1102 = vmatpush2.msra.mxu0 0.0
        %1103 = vmatprep.subr.mxu0 0.0
        %1104 = vmatpush2.msra.mxu0 0.0
        %1105 = vmatprep.mubr.f32.mxu0 0.0
        %1106 = vmatmul.mubr.f32.gmra.mxu0 %v1033
        %v1107 = vpop.f32.mrf.mxu0
        %v1108 = vadd.f32 0.0, %v1107
        %v1109 = vpop.f32.mrf.mxu0
        %1110 = vmatprep.mubr.f32.mxu0 0.0
        %1111 = vmatmul.mubr.f32.gmra.mxu0 %v1036
        %v1112 = vpop.f32.mrf.mxu0
        %v1113 = vadd.f32 0.0, %v1112
        %v1114 = vpop.f32.mrf.mxu0
        %1115 = vdwg.mxu0
        %1118 = vrot.lane.b32.xlu0 %v1108, 64
        %v1119 = vpop.permute.xlu0 %1118
        %1120 = vrot.lane.b32.xlu0 %v1113, 64
        %v1121 = vpop.permute.xlu0 %1120
        %1124 = vxpose.xlu0.b32.start [1/16] %v1119, 128
        %1125 = vxpose.xlu0.b32.cont [2/16] %v1121, 128
        %1126 = vxpose.xlu0.b32.cont [3/16] 0.0, 128
        %1127 = vxpose.xlu0.b32.cont [4/16] 0.0, 128
        %1128 = vxpose.xlu0.b32.cont [5/16] 0.0, 128
        %1129 = vxpose.xlu0.b32.cont [6/16] 0.0, 128
        %1130 = vxpose.xlu0.b32.cont [7/16] 0.0, 128
        %1131 = vxpose.xlu0.b32.cont [8/16] 0.0, 128
        %1132 = vxpose.xlu0.b32.cont [9/16] 0.0, 128
        %1133 = vxpose.xlu0.b32.cont [10/16] 0.0, 128
        %1134 = vxpose.xlu0.b32.cont [11/16] 0.0, 128
        %1135 = vxpose.xlu0.b32.cont [12/16] 0.0, 128
        %1136 = vxpose.xlu0.b32.cont [13/16] 0.0, 128
        %1137 = vxpose.xlu0.b32.cont [14/16] 0.0, 128
        %1138 = vxpose.xlu0.b32.cont [15/16] 0.0, 128
        %1139 = vxpose.xlu0.b32.end [16/16] 0.0, 128
        %v1140 = vpop.trf.xlu0
        %v1141 = vpop.trf.xlu0
        %v1142 = vpop.trf.xlu0
        %v1143 = vpop.trf.xlu0
        %v1144 = vpop.trf.xlu0
        %v1145 = vpop.trf.xlu0
        %v1146 = vpop.trf.xlu0
        %v1147 = vpop.trf.xlu0
        %v1148 = vpop.trf.xlu0
        %v1149 = vpop.trf.xlu0
        %v1150 = vpop.trf.xlu0
        %v1151 = vpop.trf.xlu0
        %v1152 = vpop.trf.xlu0
        %v1153 = vpop.trf.xlu0
        %v1154 = vpop.trf.xlu0
        %v1155 = vpop.trf.xlu0
        %1156 = vset.pattern.permute.xlu0 65
        %1157 = vperm.xlu0 %1156, %v1108
        %v1158 = vpop.permute.xlu0 %1157
        %1160 = vset.pattern.permute.xlu0 65
        %1161 = vperm.xlu0 %1160, %v1113
        %v1162 = vpop.permute.xlu0 %1161
        %v1164 = vlaneseq
        %v1165 = vshrl.u32 %v1164, 7
        %v1166 = vsub.s32 0, %v1165
        %v1167 = vrot.slane %v1140, %v1166
        %v1168 = vadd.f32 %v1158, %v1167
        %v1169 = vadd.f32 %v1162, %v1167
        %vm1170 = vcmp.gt.f32.partialorder %v1168, 0.0
        %vm1171 = vcmp.gt.f32.partialorder %v1169, 0.0
        %v1172 = vmul.f32 %v1168, 0.2
        %v1173 = vmul.f32 %v1169, 0.2
        %v1174 = vsel %vm1170, %v1168, %v1172
        %v1175 = vsel %vm1171, %v1169, %v1173
        %v1176 = vsel %vm633, %v1174, -1e+30
        %v1177 = vsel %vm634, %v1175, -1e+30
        %v1178 = vsel %vm637, %v1176, -inf
        %1179 = vmax.xlane.f32.xlu0 %v1178
        %v1180 = vpop.xlane.xlu0 %1179
        %v1181 = vsel %vm637, %v1177, -inf
        %1182 = vmax.xlane.f32.xlu0 %v1181
        %v1183 = vpop.xlane.xlu0 %1182
        %v1184 = vsub.f32 %v1176, %v1180
        %v1185 = vsub.f32 %v1177, %v1183
        %v1186 = vmul.f32 %v1184, 1.442695
        %v1187 = vpow.pop %v1186
        %v1188 = vmul.f32 %v1185, 1.442695
        %v1189 = vpow.pop %v1188
        %v1190 = vmul.f32 %v1187, %v486
        %v1191 = vmul.f32 %v1189, %v487
        %v1192 = vsel %vm637, %v1190, 0.0
        %1193 = vadd.xlane.f32.xlu0 %v1192
        %v1194 = vpop.xlane.xlu0 %1193
        %v1195 = vsel %vm637, %v1191, 0.0
        %1196 = vadd.xlane.f32.xlu0 %v1195
        %v1197 = vpop.xlane.xlu0 %1196
        %v1198 = vrcp.pop %v1194
        %v1199 = vrcp.pop %v1197
        %v1200 = vmul.f32 %v1190, %v1198
        %v1201 = vmul.f32 %v1191, %v1199
        %v1203 = vlaneseq
        %v1204 = vshrl.u32 %v1203, 7
        %v1205 = vsub.s32 0, %v1204
        %v1206 = vrot.slane %v1031, %v1205
        %v1209 = vsel %vm637, %v1200, 0
        %v1212 = vsel %vm637, %v1201, 0
        %1214 = vmatprep.subr.mxu0 0.0
        %1215 = vmatpush1.msra.mxu0 0.0
        %1216 = vmatprep.subr.mxu0 0.0
        %1217 = vmatpush1.msra.mxu0 0.0
        %1218 = vmatprep.subr.mxu0 0.0
        %1219 = vmatpush1.msra.mxu0 0.0
        %1220 = vmatprep.subr.mxu0 0.0
        %1221 = vmatpush1.msra.mxu0 0.0
        %1222 = vmatprep.subr.mxu0 0.0
        %1223 = vmatpush1.msra.mxu0 0.0
        %1224 = vmatprep.subr.mxu0 0.0
        %1225 = vmatpush1.msra.mxu0 0.0
        %1226 = vmatprep.subr.mxu0 0.0
        %1227 = vmatpush1.msra.mxu0 0.0
        %1228 = vmatprep.subr.mxu0 0.0
        %1229 = vmatpush1.msra.mxu0 0.0
        %1230 = vmatprep.subr.mxu0 0.0
        %1231 = vmatpush1.msra.mxu0 0.0
        %1232 = vmatprep.subr.mxu0 0.0
        %1233 = vmatpush1.msra.mxu0 0.0
        %1234 = vmatprep.subr.mxu0 0.0
        %1235 = vmatpush1.msra.mxu0 0.0
        %1236 = vmatprep.subr.mxu0 0.0
        %1237 = vmatpush1.msra.mxu0 0.0
        %1238 = vmatprep.subr.mxu0 0.0
        %1239 = vmatpush1.msra.mxu0 0.0
        %1240 = vmatprep.subr.mxu0 0.0
        %1241 = vmatpush1.msra.mxu0 0.0
        %1242 = vmatprep.subr.mxu0 0.0
        %1243 = vmatpush1.msra.mxu0 %v1113
        %1244 = vmatprep.subr.mxu0 0.0
        %1245 = vmatpush1.msra.mxu0 %v1108
        %1246 = vmatprep.subr.mxu0 0.0
        %1247 = vmatpush2.msra.mxu0 0.0
        %1248 = vmatprep.subr.mxu0 0.0
        %1249 = vmatpush2.msra.mxu0 0.0
        %1250 = vmatprep.subr.mxu0 0.0
        %1251 = vmatpush2.msra.mxu0 0.0
        %1252 = vmatprep.subr.mxu0 0.0
        %1253 = vmatpush2.msra.mxu0 0.0
        %1254 = vmatprep.subr.mxu0 0.0
        %1255 = vmatpush2.msra.mxu0 0.0
        %1256 = vmatprep.subr.mxu0 0.0
        %1257 = vmatpush2.msra.mxu0 0.0
        %1258 = vmatprep.subr.mxu0 0.0
        %1259 = vmatpush2.msra.mxu0 0.0
        %1260 = vmatprep.subr.mxu0 0.0
        %1261 = vmatpush2.msra.mxu0 0.0
        %1262 = vmatprep.subr.mxu0 0.0
        %1263 = vmatpush2.msra.mxu0 0.0
        %1264 = vmatprep.subr.mxu0 0.0
        %1265 = vmatpush2.msra.mxu0 0.0
        %1266 = vmatprep.subr.mxu0 0.0
        %1267 = vmatpush2.msra.mxu0 0.0
        %1268 = vmatprep.subr.mxu0 0.0
        %1269 = vmatpush2.msra.mxu0 0.0
        %1270 = vmatprep.subr.mxu0 0.0
        %1271 = vmatpush2.msra.mxu0 0.0
        %1272 = vmatprep.subr.mxu0 0.0
        %1273 = vmatpush2.msra.mxu0 0.0
        %1274 = vmatprep.subr.mxu0 0.0
        %1275 = vmatpush2.msra.mxu0 0.0
        %1276 = vmatprep.subr.mxu0 0.0
        %1277 = vmatpush2.msra.mxu0 0.0
        %1278 = vmatprep.mubr.f32.mxu0 0.0
        %1279 = vmatmul.mubr.f32.gmra.mxu0 %v1209
        %v1280 = vpop.f32.mrf.mxu0
        %v1281 = vadd.f32 %v1206, %v1280
        %v1282 = vpop.f32.mrf.mxu0
        %1283 = vmatprep.mubr.f32.mxu0 0.0
        %1284 = vmatmul.mubr.f32.gmra.mxu0 %v1212
        %v1285 = vpop.f32.mrf.mxu0
        %v1286 = vadd.f32 %v1206, %v1285
        %v1287 = vpop.f32.mrf.mxu0
        %1288 = vdwg.mxu0
        %v1289 = vmax.f32 %v1281, 0.0
        %v1290 = vmax.f32 %v1286, 0.0
        %v1292 = vsel %vm637, %v488, 0
        %1294 = vmatprep.subr.mxu0 0.0
        %1295 = vmatpush1.msra.mxu0 0.0
        %1296 = vmatprep.subr.mxu0 0.0
        %1297 = vmatpush1.msra.mxu0 0.0
        %1298 = vmatprep.subr.mxu0 0.0
        %1299 = vmatpush1.msra.mxu0 0.0
        %1300 = vmatprep.subr.mxu0 0.0
        %1301 = vmatpush1.msra.mxu0 0.0
        %1302 = vmatprep.subr.mxu0 0.0
        %1303 = vmatpush1.msra.mxu0 0.0
        %1304 = vmatprep.subr.mxu0 0.0
        %1305 = vmatpush1.msra.mxu0 0.0
        %1306 = vmatprep.subr.mxu0 0.0
        %1307 = vmatpush1.msra.mxu0 0.0
        %1308 = vmatprep.subr.mxu0 0.0
        %1309 = vmatpush1.msra.mxu0 0.0
        %1310 = vmatprep.subr.mxu0 0.0
        %1311 = vmatpush1.msra.mxu0 0.0
        %1312 = vmatprep.subr.mxu0 0.0
        %1313 = vmatpush1.msra.mxu0 0.0
        %1314 = vmatprep.subr.mxu0 0.0
        %1315 = vmatpush1.msra.mxu0 0.0
        %1316 = vmatprep.subr.mxu0 0.0
        %1317 = vmatpush1.msra.mxu0 0.0
        %1318 = vmatprep.subr.mxu0 0.0
        %1319 = vmatpush1.msra.mxu0 0.0
        %1320 = vmatprep.subr.mxu0 0.0
        %1321 = vmatpush1.msra.mxu0 0.0
        %1322 = vmatprep.subr.mxu0 0.0
        %1323 = vmatpush1.msra.mxu0 %v1290
        %1324 = vmatprep.subr.mxu0 0.0
        %1325 = vmatpush1.msra.mxu0 %v1289
        %1326 = vmatprep.subr.mxu0 0.0
        %1327 = vmatpush2.msra.mxu0 0.0
        %1328 = vmatprep.subr.mxu0 0.0
        %1329 = vmatpush2.msra.mxu0 0.0
        %1330 = vmatprep.subr.mxu0 0.0
        %1331 = vmatpush2.msra.mxu0 0.0
        %1332 = vmatprep.subr.mxu0 0.0
        %1333 = vmatpush2.msra.mxu0 0.0
        %1334 = vmatprep.subr.mxu0 0.0
        %1335 = vmatpush2.msra.mxu0 0.0
        %1336 = vmatprep.subr.mxu0 0.0
        %1337 = vmatpush2.msra.mxu0 0.0
        %1338 = vmatprep.subr.mxu0 0.0
        %1339 = vmatpush2.msra.mxu0 0.0
        %1340 = vmatprep.subr.mxu0 0.0
        %1341 = vmatpush2.msra.mxu0 0.0
        %1342 = vmatprep.subr.mxu0 0.0
        %1343 = vmatpush2.msra.mxu0 0.0
        %1344 = vmatprep.subr.mxu0 0.0
        %1345 = vmatpush2.msra.mxu0 0.0
        %1346 = vmatprep.subr.mxu0 0.0
        %1347 = vmatpush2.msra.mxu0 0.0
        %1348 = vmatprep.subr.mxu0 0.0
        %1349 = vmatpush2.msra.mxu0 0.0
        %1350 = vmatprep.subr.mxu0 0.0
        %1351 = vmatpush2.msra.mxu0 0.0
        %1352 = vmatprep.subr.mxu0 0.0
        %1353 = vmatpush2.msra.mxu0 0.0
        %1354 = vmatprep.subr.mxu0 0.0
        %1355 = vmatpush2.msra.mxu0 0.0
        %1356 = vmatprep.subr.mxu0 0.0
        %1357 = vmatpush2.msra.mxu0 0.0
        %1358 = vmatprep.mubr.f32.mxu0 0.0
        %1359 = vmatmul.mubr.f32.gmra.mxu0 %v1292
        %v1360 = vpop.f32.mrf.mxu0
        %v1361 = vadd.f32 0.0, %v1360
        %v1362 = vpop.f32.mrf.mxu0
        %1363 = vdwg.mxu0
        %v1364 = vld [vmem:[#allocation8] sm:$0xff]
        %v1365 = vld [vmem:[#allocation8 + $0x8] sm:$0xff]
        %v1366 = vld [vmem:[#allocation8 + $0x10] sm:$0xff]
        %v1367 = vld [vmem:[#allocation8 + $0x18] sm:$0xff]
        %v1368 = vld [vmem:[#allocation8 + $0x20] sm:$0xff]
        %v1369 = vld [vmem:[#allocation8 + $0x28] sm:$0xff]
        %v1370 = vld [vmem:[#allocation8 + $0x30] sm:$0xff]
        %v1371 = vld [vmem:[#allocation8 + $0x38] sm:$0xff]
        %v1372 = vld [vmem:[#allocation8 + $0x40] sm:$0x3]
        %v1373 = vld [vmem:[%s10] sm:$0x1]
        %v1375 = vlaneseq
        %v1376 = vshrl.u32 %v1375, 7
        %v1377 = vsub.s32 0, %v1376
        %v1378 = vrot.slane %v1373, %v1377
        %v1381 = vsel %vm761, %v1361, 0
        %v1384 = vsel %vm768, %v1372, 0
        %1386 = vmatprep.subr.mxu0 0.0
        %1387 = vmatpush1.msra.mxu0 0.0
        %1388 = vmatprep.subr.mxu0 0.0
        %1389 = vmatpush1.msra.mxu0 0.0
        %1390 = vmatprep.subr.mxu0 0.0
        %1391 = vmatpush1.msra.mxu0 0.0
        %1392 = vmatprep.subr.mxu0 0.0
        %1393 = vmatpush1.msra.mxu0 0.0
        %1394 = vmatprep.subr.mxu0 0.0
        %1395 = vmatpush1.msra.mxu0 0.0
        %1396 = vmatprep.subr.mxu0 0.0
        %1397 = vmatpush1.msra.mxu0 0.0
        %1398 = vmatprep.subr.mxu0 0.0
        %1399 = vmatpush1.msra.mxu0 0.0
        %1400 = vmatprep.subr.mxu0 0.0
        %1401 = vmatpush1.msra.mxu0 %v1384
        %1402 = vmatprep.subr.mxu0 0.0
        %1403 = vmatpush1.msra.mxu0 %v1371
        %1404 = vmatprep.subr.mxu0 0.0
        %1405 = vmatpush1.msra.mxu0 %v1370
        %1406 = vmatprep.subr.mxu0 0.0
        %1407 = vmatpush1.msra.mxu0 %v1369
        %1408 = vmatprep.subr.mxu0 0.0
        %1409 = vmatpush1.msra.mxu0 %v1368
        %1410 = vmatprep.subr.mxu0 0.0
        %1411 = vmatpush1.msra.mxu0 %v1367
        %1412 = vmatprep.subr.mxu0 0.0
        %1413 = vmatpush1.msra.mxu0 %v1366
        %1414 = vmatprep.subr.mxu0 0.0
        %1415 = vmatpush1.msra.mxu0 %v1365
        %1416 = vmatprep.subr.mxu0 0.0
        %1417 = vmatpush1.msra.mxu0 %v1364
        %1418 = vmatprep.subr.mxu0 0.0
        %1419 = vmatpush2.msra.mxu0 0.0
        %1420 = vmatprep.subr.mxu0 0.0
        %1421 = vmatpush2.msra.mxu0 0.0
        %1422 = vmatprep.subr.mxu0 0.0
        %1423 = vmatpush2.msra.mxu0 0.0
        %1424 = vmatprep.subr.mxu0 0.0
        %1425 = vmatpush2.msra.mxu0 0.0
        %1426 = vmatprep.subr.mxu0 0.0
        %1427 = vmatpush2.msra.mxu0 0.0
        %1428 = vmatprep.subr.mxu0 0.0
        %1429 = vmatpush2.msra.mxu0 0.0
        %1430 = vmatprep.subr.mxu0 0.0
        %1431 = vmatpush2.msra.mxu0 0.0
        %1432 = vmatprep.subr.mxu0 0.0
        %1433 = vmatpush2.msra.mxu0 0.0
        %1434 = vmatprep.subr.mxu0 0.0
        %1435 = vmatpush2.msra.mxu0 0.0
        %1436 = vmatprep.subr.mxu0 0.0
        %1437 = vmatpush2.msra.mxu0 0.0
        %1438 = vmatprep.subr.mxu0 0.0
        %1439 = vmatpush2.msra.mxu0 0.0
        %1440 = vmatprep.subr.mxu0 0.0
        %1441 = vmatpush2.msra.mxu0 0.0
        %1442 = vmatprep.subr.mxu0 0.0
        %1443 = vmatpush2.msra.mxu0 0.0
        %1444 = vmatprep.subr.mxu0 0.0
        %1445 = vmatpush2.msra.mxu0 0.0
        %1446 = vmatprep.subr.mxu0 0.0
        %1447 = vmatpush2.msra.mxu0 0.0
        %1448 = vmatprep.subr.mxu0 0.0
        %1449 = vmatpush2.msra.mxu0 0.0
        %1450 = vmatprep.mubr.f32.mxu0 0.0
        %1451 = vmatmul.mubr.f32.gmra.mxu0 %v1381
        %v1452 = vpop.f32.mrf.mxu0
        %v1453 = vadd.f32 %v1378, %v1452
        %v1454 = vpop.f32.mrf.mxu0
        %1455 = vdwg.mxu0
        %1456 = vst [vmem:[%s473] sm:$0x3] %v1453
        %s1457 = sand.u32 %s284, 1
        %s1458 = scalar_lea.sflag [#allocation4], %s1457
        %s1459 = sand.u32 %s284, 1
        %s1460 = smul.addr %s1459, 2
        %s1461 = scalar_lea.vmem [#allocation10], %s1460
        // Predicated region
        $region81: #{tpu_custom_call.1} parent=63 // pred_check
          %p1462 = pneg %p294
        $region82: #{tpu_custom_call.1} parent=63 // pred_check_branch
          %1464 = sbr.rel (%p1462) target = $region84
        $region83: #{tpu_custom_call.1} parent=63 // pred_region
          %s1466 = ssub.s32 32, 32
          %1467 = vsyncadd %s1458, %s1466
          %s1468 = smul.addr %s30, 32
          %s1469 = scalar_lea.hbm %s11, %s1468
          %s1471 = sshll.u32 %s1461, 4
          %s1472 = int_to_ptr.vmem [resolvable:$true] %s1471
          %1474 = dma.vmem_to_hbm [thread:$0]  %s1472, 32, %s1469, %s1458
        $region84: #{tpu_custom_call.1} parent=63 // pred_fallthru
          _
      $region64: #{tpu_custom_call.1} parent=5 // pred_fallthru
        _
      %p1475 = scmp.le.s32.totalorder 2, %s25
      // Predicated region
      $region85: #{tpu_custom_call.1} parent=5 // pred_check
        %p1476 = pneg %p1475
      $region86: #{tpu_custom_call.1} parent=5 // pred_check_branch
        %1478 = sbr.rel (%p1476) target = $region88
      $region87: #{tpu_custom_call.1} parent=5 // pred_region
        %s1479 = ssub.s32 %s25, 2
        // Predicated region
        $region89: #{tpu_custom_call.1} parent=87 // pred_check
          %p1480 = pneg %p300
        $region90: #{tpu_custom_call.1} parent=87 // pred_check_branch
          %1482 = sbr.rel (%p1480) target = $region92
        $region91: #{tpu_custom_call.1} parent=87 // pred_region
          %s1483 = sand.u32 %s285, 1
          %s1484 = scalar_lea.sflag [#allocation4], %s1483
          %s1485 = sand.u32 %s285, 1
          %s1486 = smul.addr %s1485, 2
          %s1487 = scalar_lea.vmem [#allocation10], %s1486
          %1488 = dma.done %s1484, 32
        $region92: #{tpu_custom_call.1} parent=87 // pred_fallthru
          _
      $region88: #{tpu_custom_call.1} parent=5 // pred_fallthru
        _
    $region6: #{tpu_custom_call.1} parent=1 // loop_footer
      %s29 = sadd.s32 1, %s25
    $region7: #{tpu_custom_call.1} parent=1 // loop_footer_branch
      %24 = sbr.rel target = $region3
    $region8: #{tpu_custom_call.1} parent=1 // loop_exit
      _
    %1489 = vsyncpa [#allocation3], 1
    %s1490 = scalar_lea.sflag [#allocation3], 1
    %1491 = vsyncpa %s1490, 1
    %1492 = vsyncpa [#allocation6], 1
    %1493 = vsyncpa [#allocation9], 1
    %1494 = vsyncpa [#allocation4], 1
    %s1495 = scalar_lea.sflag [#allocation4], 1
    %1496 = vsyncpa %s1495, 1

</llo_original>
